<compile_context>
chip_gen: v7x
topology: tpu7x:2x2x1
jax: 0.10.0
libtpu: 0.0.40
codegen_flags: <defaults>
</compile_context>

<pallas_src>
import jax
import jax.numpy as jnp
from jax.experimental import pallas as pl
from jax.experimental.pallas import tpu as pltpu


NUM_CLASSES = 21
IGNORE_INDEX = NUM_CLASSES          # as in the PyTorch module
MAX_TILE_HW = 8192                  # pixels (lanes) per grid step, multiple of 128
NUM_SPLITS = 2                      # megacore split of the pixel range (v7x); no-op on 1-TC chips
GT_SCALES = (1.0, 0.1, 0.2, 0.3, 0.4, 0.5)   # out, gt_pre5, gt_pre4, gt_pre3, gt_pre2, gt_pre1


def _round_up(x, m):
    return ((x + m - 1) // m) * m


def _wce_fused_kernel(w_ref, tgt_ref, l0, l1, l2, l3, l4, l5, out_ref, acc_ref):
    """Fused weighted-CE partial sums for 6 logit tensors sharing one target.

    acc_ref rows 0..5 : per-lane partial numerators  sum(w[t] * nll_k)  per logits tensor
    acc_ref row  6    : per-lane partial denominator sum(w[t])
    acc_ref row  7    : unused (kept zero)
    """
    n = pl.program_id(1)
    j = pl.program_id(2)
    is_first = jnp.logical_and(n == 0, j == 0)
    is_last = jnp.logical_and(n == pl.num_programs(1) - 1,
                              j == pl.num_programs(2) - 1)

    @pl.when(is_first)
    def _():
        acc_ref[...] = jnp.zeros_like(acc_ref)

    C = w_ref.shape[0]
    T = tgt_ref.shape[-1]

    t = tgt_ref[...].reshape(1, T)                                  # (1, T) int32 targets
    cls_ids = jax.lax.broadcasted_iota(jnp.int32, (C, T), 0)        # class id per sublane row
    onehot = (cls_ids == t).astype(jnp.float32)                     # (C, T); all-zero column if ignored/padded
    w = w_ref[...].astype(jnp.float32)                              # (C, 1) class weights
    wt = jnp.sum(onehot * w, axis=0, keepdims=True)                 # (1, T) per-pixel weight (0 if ignored)

    for k, lref in enumerate((l0, l1, l2, l3, l4, l5)):
        x = lref[...].reshape(C, T).astype(jnp.float32)             # (C, T) logits, classes on sublanes
        m = jnp.max(x, axis=0, keepdims=True)                       # (1, T)
        lse = m + jnp.log(jnp.sum(jnp.exp(x - m), axis=0, keepdims=True))
        xt = jnp.sum(onehot * x, axis=0, keepdims=True)             # target-class logit (0 if ignored)
        acc_ref[pl.ds(k, 1), :] += wt * (lse - xt)                  # weighted NLL per-lane partials
    acc_ref[pl.ds(6, 1), :] += wt                                   # shared denominator partials

    @pl.when(is_last)
    def _():
        out_ref[...] = acc_ref[...].reshape(out_ref.shape)


def gt_cross_entropy_loss(gt_pre, out, target, cls_weights):
    """Forward pass of GT_CrossEntropyLoss (all six weighted CE losses in one kernel)."""
    gt_pre5, gt_pre4, gt_pre3, gt_pre2, gt_pre1 = gt_pre
    logits = (out, gt_pre5, gt_pre4, gt_pre3, gt_pre2, gt_pre1)

    N, C, H, W = out.shape
    HW = H * W

    tile = min(MAX_TILE_HW, _round_up(HW, 128))
    HW_pad = _round_up(HW, NUM_SPLITS * tile)
    bps = HW_pad // (NUM_SPLITS * tile)          # HW blocks per megacore split
    pad = HW_pad - HW

    def prep_logits(x):
        x = x.reshape(N, C, HW)                  # free reshape; keeps NCHW memory order
        if pad:
            # TODO(synk): padded pixels copy the tensor once; for tile-aligned H*W this is free.
            x = jnp.pad(x, ((0, 0), (0, 0), (0, pad)))
        return x

    logits = tuple(prep_logits(x) for x in logits)

    t = target.reshape(N, 1, HW).astype(jnp.int32)
    if pad:
        # padded pixels get ignore_index -> contribute 0 to numerators and denominator
        t = jnp.pad(t, ((0, 0), (0, 0), (0, pad)), constant_values=IGNORE_INDEX)

    w = cls_weights.reshape(C, 1).astype(jnp.float32)

    logit_spec = pl.BlockSpec((1, C, tile), lambda s, n, j: (n, 0, s * bps + j))
    tgt_spec = pl.BlockSpec((1, 1, tile), lambda s, n, j: (n, 0, s * bps + j))
    w_spec = pl.BlockSpec((C, 1), lambda s, n, j: (0, 0))

    partials = pl.pallas_call(
        _wce_fused_kernel,
        out_shape=jax.ShapeDtypeStruct((NUM_SPLITS, 8, tile), jnp.float32),
        grid_spec=pltpu.PrefetchScalarGridSpec(
            num_scalar_prefetch=0,
            grid=(NUM_SPLITS, N, bps),
            in_specs=[w_spec, tgt_spec] + [logit_spec] * 6,
            out_specs=pl.BlockSpec((1, 8, tile), lambda s, n, j: (s, 0, 0)),
            scratch_shapes=[pltpu.VMEM((8, tile), jnp.float32)],
        ),
        compiler_params=pltpu.CompilerParams(
            dimension_semantics=("parallel", "arbitrary", "arbitrary")),
    )(w, t, *logits)

    # Tiny epilogue in JAX: reduce per-lane/per-split partials, apply the 1.0/0.1..0.5
    # scales and the single shared denominator (identical for all six losses).
    sums = jnp.sum(partials, axis=(0, 2))        # (8,): rows 0..5 numerators, row 6 denominator
    scales = jnp.asarray(GT_SCALES, dtype=jnp.float32)
    return jnp.dot(scales, sums[:6]) / sums[6]


def _reference_wce(logits_nchw, target_nhw, cls_weights):
    """Pure-JAX reference (PyTorch weighted CE with ignore_index) for correctness checks."""
    N, C, H, W = logits_nchw.shape
    x = jnp.transpose(logits_nchw, (0, 2, 3, 1)).reshape(-1, C).astype(jnp.float32)
    t = target_nhw.reshape(-1).astype(jnp.int32)
    valid = t != IGNORE_INDEX
    t_safe = jnp.where(valid, t, 0)
    logp = jax.nn.log_softmax(x, axis=-1)
    nll = -jnp.take_along_axis(logp, t_safe[:, None], axis=-1)[:, 0]
    w = cls_weights[t_safe] * valid.astype(jnp.float32)
    return jnp.sum(w * nll) / jnp.sum(w)


if __name__ == "__main__":
    key = jax.random.PRNGKey(0)
    N, C, H, W = 2, NUM_CLASSES, 16, 16

    # deterministic class-weight parameter (shape (num_classes,))
    cls_weights = jnp.linspace(0.5, 1.5, C).astype(jnp.float32)

    keys = jax.random.split(key, 8)
    out = jax.random.normal(keys[0], (N, C, H, W), dtype=jnp.float32)
    gt_pre = tuple(jax.random.normal(keys[1 + k], (N, C, H, W), dtype=jnp.float32)
                   for k in range(5))
    # targets in [0, num_classes]; value == num_classes hits ignore_index
    target = jax.random.randint(keys[6], (N, H, W), 0, NUM_CLASSES + 1, dtype=jnp.int32)

    loss = gt_cross_entropy_loss(gt_pre, out, target, cls_weights)
    loss = jax.block_until_ready(loss)

    # sanity check against pure-JAX reference
    ref = (_reference_wce(out, target, cls_weights)
           + _reference_wce(gt_pre[0], target, cls_weights) * 0.1
           + _reference_wce(gt_pre[1], target, cls_weights) * 0.2
           + _reference_wce(gt_pre[2], target, cls_weights) * 0.3
           + _reference_wce(gt_pre[3], target, cls_weights) * 0.4
           + _reference_wce(gt_pre[4], target, cls_weights) * 0.5)
    assert jnp.allclose(loss, ref, rtol=1e-4, atol=1e-5), (loss, ref)

    print("KERNEL_OK")
</pallas_src>

<mosaic_0001>
module attributes {stable_mosaic.version = 11 : i64} {
  func.func @_wce_fused_kernel(%arg0: i32, %arg1: i32, %arg2: i32, %arg3: memref<21x1xf32, #tpu.memory_space<vmem>>, %arg4: memref<1x1x256xi32, #tpu.memory_space<vmem>>, %arg5: memref<1x21x256xf32, #tpu.memory_space<vmem>>, %arg6: memref<1x21x256xf32, #tpu.memory_space<vmem>>, %arg7: memref<1x21x256xf32, #tpu.memory_space<vmem>>, %arg8: memref<1x21x256xf32, #tpu.memory_space<vmem>>, %arg9: memref<1x21x256xf32, #tpu.memory_space<vmem>>, %arg10: memref<1x21x256xf32, #tpu.memory_space<vmem>>, %arg11: memref<1x8x256xf32, #tpu.memory_space<vmem>>, %arg12: memref<8x256xf32, #tpu.memory_space<vmem>>) attributes {dimension_semantics = [#tpu.dimension_semantics<parallel>, #tpu.dimension_semantics<arbitrary>, #tpu.dimension_semantics<arbitrary>], iteration_bounds = array<i64: 2, 2, 1>, scalar_prefetch = 0 : i64, scratch_operands = 1 : i64, tpu.core_type = #tpu.core_type<tc>, window_params = [{pipeline_mode = #tpu.pipeline_mode<synchronous>, transform_indices = @transform_0, window_bounds = array<i64: 21, 1>}, {transform_indices = @transform_1, window_bounds = array<i64: 1, 1, 256>}, {transform_indices = @transform_2, window_bounds = array<i64: 1, 21, 256>}, {transform_indices = @transform_3, window_bounds = array<i64: 1, 21, 256>}, {transform_indices = @transform_4, window_bounds = array<i64: 1, 21, 256>}, {transform_indices = @transform_5, window_bounds = array<i64: 1, 21, 256>}, {transform_indices = @transform_6, window_bounds = array<i64: 1, 21, 256>}, {transform_indices = @transform_7, window_bounds = array<i64: 1, 21, 256>}, {transform_indices = @transform_8, window_bounds = array<i64: 1, 8, 256>}]} {
    %c0_i32 = arith.constant 0 : i32
    %0 = arith.cmpi eq, %arg1, %c0_i32 : i32
    %c0_i32_0 = arith.constant 0 : i32
    %1 = arith.cmpi eq, %arg2, %c0_i32_0 : i32
    %2 = arith.andi %0, %1 : i1
    %c1_i32 = arith.constant 1 : i32
    %3 = arith.cmpi eq, %arg1, %c1_i32 : i32
    %c0_i32_1 = arith.constant 0 : i32
    %4 = arith.cmpi eq, %arg2, %c0_i32_1 : i32
    %5 = arith.andi %3, %4 : i1
    %6 = arith.extui %2 : i1 to i32
    %c0_i32_2 = arith.constant 0 : i32
    %7 = arith.cmpi ne, %6, %c0_i32_2 : i32
    scf.if %7 {
      %cst_66 = arith.constant 0.000000e+00 : f32
      %139 = vector.broadcast %cst_66 : f32 to vector<8x256xf32>
      %c0_67 = arith.constant 0 : index
      %c0_68 = arith.constant 0 : index
      %140 = vector.load %arg12[%c0_67, %c0_68] : memref<8x256xf32, #tpu.memory_space<vmem>>, vector<8x256xf32>
      tpu.vector_store %arg12[%c0_67, %c0_68], %139 {strides = array<i32>} : memref<8x256xf32, #tpu.memory_space<vmem>>, vector<8x256xf32>,
    } else {
    }
    %c0 = arith.constant 0 : index
    %c0_3 = arith.constant 0 : index
    %c0_4 = arith.constant 0 : index
    %8 = vector.load %arg4[%c0, %c0_3, %c0_4] : memref<1x1x256xi32, #tpu.memory_space<vmem>>, vector<1x1x256xi32>
    %9 = vector.shape_cast %8 : vector<1x1x256xi32> to vector<1x256xi32>
    %10 = tpu.iota {dimensions = array<i32: 0>} : vector<21x256xi32>
    %11 = vector.broadcast %9 : vector<1x256xi32> to vector<21x256xi32>
    %12 = arith.cmpi eq, %10, %11 : vector<21x256xi32>
    %13 = arith.extui %12 : vector<21x256xi1> to vector<21x256xi32>
    %14 = arith.sitofp %13 : vector<21x256xi32> to vector<21x256xf32>
    %c0_5 = arith.constant 0 : index
    %c0_6 = arith.constant 0 : index
    %15 = vector.load %arg3[%c0_5, %c0_6] : memref<21x1xf32, #tpu.memory_space<vmem>>, vector<21x1xf32>
    %16 = vector.broadcast %15 : vector<21x1xf32> to vector<21x256xf32>
    %17 = arith.mulf %14, %16 : vector<21x256xf32>
    %cst = arith.constant dense<0.000000e+00> : vector<256xf32>
    %18 = vector.multi_reduction <add>, %17, %cst [0] : vector<21x256xf32> to vector<256xf32>
    %19 = vector.shape_cast %18 : vector<256xf32> to vector<1x256xf32>
    %c0_7 = arith.constant 0 : index
    %c0_8 = arith.constant 0 : index
    %c0_9 = arith.constant 0 : index
    %20 = vector.load %arg5[%c0_7, %c0_8, %c0_9] : memref<1x21x256xf32, #tpu.memory_space<vmem>>, vector<1x21x256xf32>
    %21 = vector.shape_cast %20 : vector<1x21x256xf32> to vector<21x256xf32>
    %cst_10 = arith.constant dense<0xFF800000> : vector<256xf32>
    %22 = vector.multi_reduction <maximumf>, %21, %cst_10 [0] : vector<21x256xf32> to vector<256xf32>
    %23 = vector.shape_cast %22 : vector<256xf32> to vector<1x256xf32>
    %24 = vector.broadcast %23 : vector<1x256xf32> to vector<21x256xf32>
    %25 = arith.subf %21, %24 : vector<21x256xf32>
    %26 = math.exp %25 : vector<21x256xf32>
    %cst_11 = arith.constant dense<0.000000e+00> : vector<256xf32>
    %27 = vector.multi_reduction <add>, %26, %cst_11 [0] : vector<21x256xf32> to vector<256xf32>
    %28 = vector.shape_cast %27 : vector<256xf32> to vector<1x256xf32>
    %29 = math.log %28 : vector<1x256xf32>
    %30 = arith.addf %23, %29 : vector<1x256xf32>
    %31 = arith.mulf %14, %21 : vector<21x256xf32>
    %cst_12 = arith.constant dense<0.000000e+00> : vector<256xf32>
    %32 = vector.multi_reduction <add>, %31, %cst_12 [0] : vector<21x256xf32> to vector<256xf32>
    %33 = vector.shape_cast %32 : vector<256xf32> to vector<1x256xf32>
    %c0_13 = arith.constant 0 : index
    %c0_14 = arith.constant 0 : index
    %34 = vector.load %arg12[%c0_13, %c0_14] : memref<8x256xf32, #tpu.memory_space<vmem>>, vector<1x256xf32>
    %35 = arith.subf %30, %33 : vector<1x256xf32>
    %36 = arith.mulf %19, %35 : vector<1x256xf32>
    %37 = arith.addf %34, %36 : vector<1x256xf32>
    %c0_15 = arith.constant 0 : index
    %c0_16 = arith.constant 0 : index
    %38 = vector.load %arg12[%c0_15, %c0_16] : memref<8x256xf32, #tpu.memory_space<vmem>>, vector<1x256xf32>
    tpu.vector_store %arg12[%c0_15, %c0_16], %37 {strides = array<i32>} : memref<8x256xf32, #tpu.memory_space<vmem>>, vector<1x256xf32>,
    %c0_17 = arith.constant 0 : index
    %c0_18 = arith.constant 0 : index
    %c0_19 = arith.constant 0 : index
    %39 = vector.load %arg6[%c0_17, %c0_18, %c0_19] : memref<1x21x256xf32, #tpu.memory_space<vmem>>, vector<1x21x256xf32>
    %40 = vector.shape_cast %39 : vector<1x21x256xf32> to vector<21x256xf32>
    %cst_20 = arith.constant dense<0xFF800000> : vector<256xf32>
    %41 = vector.multi_reduction <maximumf>, %40, %cst_20 [0] : vector<21x256xf32> to vector<256xf32>
    %42 = vector.shape_cast %41 : vector<256xf32> to vector<1x256xf32>
    %43 = vector.broadcast %42 : vector<1x256xf32> to vector<21x256xf32>
    %44 = arith.subf %40, %43 : vector<21x256xf32>
    %45 = math.exp %44 : vector<21x256xf32>
    %cst_21 = arith.constant dense<0.000000e+00> : vector<256xf32>
    %46 = vector.multi_reduction <add>, %45, %cst_21 [0] : vector<21x256xf32> to vector<256xf32>
    %47 = vector.shape_cast %46 : vector<256xf32> to vector<1x256xf32>
    %48 = math.log %47 : vector<1x256xf32>
    %49 = arith.addf %42, %48 : vector<1x256xf32>
    %50 = arith.mulf %14, %40 : vector<21x256xf32>
    %cst_22 = arith.constant dense<0.000000e+00> : vector<256xf32>
    %51 = vector.multi_reduction <add>, %50, %cst_22 [0] : vector<21x256xf32> to vector<256xf32>
    %52 = vector.shape_cast %51 : vector<256xf32> to vector<1x256xf32>
    %c1 = arith.constant 1 : index
    %c0_23 = arith.constant 0 : index
    %53 = vector.load %arg12[%c1, %c0_23] : memref<8x256xf32, #tpu.memory_space<vmem>>, vector<1x256xf32>
    %54 = arith.subf %49, %52 : vector<1x256xf32>
    %55 = arith.mulf %19, %54 : vector<1x256xf32>
    %56 = arith.addf %53, %55 : vector<1x256xf32>
    %c1_24 = arith.constant 1 : index
    %c0_25 = arith.constant 0 : index
    %57 = vector.load %arg12[%c1_24, %c0_25] : memref<8x256xf32, #tpu.memory_space<vmem>>, vector<1x256xf32>
    tpu.vector_store %arg12[%c1_24, %c0_25], %56 {strides = array<i32>} : memref<8x256xf32, #tpu.memory_space<vmem>>, vector<1x256xf32>,
    %c0_26 = arith.constant 0 : index
    %c0_27 = arith.constant 0 : index
    %c0_28 = arith.constant 0 : index
    %58 = vector.load %arg7[%c0_26, %c0_27, %c0_28] : memref<1x21x256xf32, #tpu.memory_space<vmem>>, vector<1x21x256xf32>
    %59 = vector.shape_cast %58 : vector<1x21x256xf32> to vector<21x256xf32>
    %cst_29 = arith.constant dense<0xFF800000> : vector<256xf32>
    %60 = vector.multi_reduction <maximumf>, %59, %cst_29 [0] : vector<21x256xf32> to vector<256xf32>
    %61 = vector.shape_cast %60 : vector<256xf32> to vector<1x256xf32>
    %62 = vector.broadcast %61 : vector<1x256xf32> to vector<21x256xf32>
    %63 = arith.subf %59, %62 : vector<21x256xf32>
    %64 = math.exp %63 : vector<21x256xf32>
    %cst_30 = arith.constant dense<0.000000e+00> : vector<256xf32>
    %65 = vector.multi_reduction <add>, %64, %cst_30 [0] : vector<21x256xf32> to vector<256xf32>
    %66 = vector.shape_cast %65 : vector<256xf32> to vector<1x256xf32>
    %67 = math.log %66 : vector<1x256xf32>
    %68 = arith.addf %61, %67 : vector<1x256xf32>
    %69 = arith.mulf %14, %59 : vector<21x256xf32>
    %cst_31 = arith.constant dense<0.000000e+00> : vector<256xf32>
    %70 = vector.multi_reduction <add>, %69, %cst_31 [0] : vector<21x256xf32> to vector<256xf32>
    %71 = vector.shape_cast %70 : vector<256xf32> to vector<1x256xf32>
    %c2 = arith.constant 2 : index
    %c0_32 = arith.constant 0 : index
    %72 = vector.load %arg12[%c2, %c0_32] : memref<8x256xf32, #tpu.memory_space<vmem>>, vector<1x256xf32>
    %73 = arith.subf %68, %71 : vector<1x256xf32>
    %74 = arith.mulf %19, %73 : vector<1x256xf32>
    %75 = arith.addf %72, %74 : vector<1x256xf32>
    %c2_33 = arith.constant 2 : index
    %c0_34 = arith.constant 0 : index
    %76 = vector.load %arg12[%c2_33, %c0_34] : memref<8x256xf32, #tpu.memory_space<vmem>>, vector<1x256xf32>
    tpu.vector_store %arg12[%c2_33, %c0_34], %75 {strides = array<i32>} : memref<8x256xf32, #tpu.memory_space<vmem>>, vector<1x256xf32>,
    %c0_35 = arith.constant 0 : index
    %c0_36 = arith.constant 0 : index
    %c0_37 = arith.constant 0 : index
    %77 = vector.load %arg8[%c0_35, %c0_36, %c0_37] : memref<1x21x256xf32, #tpu.memory_space<vmem>>, vector<1x21x256xf32>
    %78 = vector.shape_cast %77 : vector<1x21x256xf32> to vector<21x256xf32>
    %cst_38 = arith.constant dense<0xFF800000> : vector<256xf32>
    %79 = vector.multi_reduction <maximumf>, %78, %cst_38 [0] : vector<21x256xf32> to vector<256xf32>
    %80 = vector.shape_cast %79 : vector<256xf32> to vector<1x256xf32>
    %81 = vector.broadcast %80 : vector<1x256xf32> to vector<21x256xf32>
    %82 = arith.subf %78, %81 : vector<21x256xf32>
    %83 = math.exp %82 : vector<21x256xf32>
    %cst_39 = arith.constant dense<0.000000e+00> : vector<256xf32>
    %84 = vector.multi_reduction <add>, %83, %cst_39 [0] : vector<21x256xf32> to vector<256xf32>
    %85 = vector.shape_cast %84 : vector<256xf32> to vector<1x256xf32>
    %86 = math.log %85 : vector<1x256xf32>
    %87 = arith.addf %80, %86 : vector<1x256xf32>
    %88 = arith.mulf %14, %78 : vector<21x256xf32>
    %cst_40 = arith.constant dense<0.000000e+00> : vector<256xf32>
    %89 = vector.multi_reduction <add>, %88, %cst_40 [0] : vector<21x256xf32> to vector<256xf32>
    %90 = vector.shape_cast %89 : vector<256xf32> to vector<1x256xf32>
    %c3 = arith.constant 3 : index
    %c0_41 = arith.constant 0 : index
    %91 = vector.load %arg12[%c3, %c0_41] : memref<8x256xf32, #tpu.memory_space<vmem>>, vector<1x256xf32>
    %92 = arith.subf %87, %90 : vector<1x256xf32>
    %93 = arith.mulf %19, %92 : vector<1x256xf32>
    %94 = arith.addf %91, %93 : vector<1x256xf32>
    %c3_42 = arith.constant 3 : index
    %c0_43 = arith.constant 0 : index
    %95 = vector.load %arg12[%c3_42, %c0_43] : memref<8x256xf32, #tpu.memory_space<vmem>>, vector<1x256xf32>
    tpu.vector_store %arg12[%c3_42, %c0_43], %94 {strides = array<i32>} : memref<8x256xf32, #tpu.memory_space<vmem>>, vector<1x256xf32>,
    %c0_44 = arith.constant 0 : index
    %c0_45 = arith.constant 0 : index
    %c0_46 = arith.constant 0 : index
    %96 = vector.load %arg9[%c0_44, %c0_45, %c0_46] : memref<1x21x256xf32, #tpu.memory_space<vmem>>, vector<1x21x256xf32>
    %97 = vector.shape_cast %96 : vector<1x21x256xf32> to vector<21x256xf32>
    %cst_47 = arith.constant dense<0xFF800000> : vector<256xf32>
    %98 = vector.multi_reduction <maximumf>, %97, %cst_47 [0] : vector<21x256xf32> to vector<256xf32>
    %99 = vector.shape_cast %98 : vector<256xf32> to vector<1x256xf32>
    %100 = vector.broadcast %99 : vector<1x256xf32> to vector<21x256xf32>
    %101 = arith.subf %97, %100 : vector<21x256xf32>
    %102 = math.exp %101 : vector<21x256xf32>
    %cst_48 = arith.constant dense<0.000000e+00> : vector<256xf32>
    %103 = vector.multi_reduction <add>, %102, %cst_48 [0] : vector<21x256xf32> to vector<256xf32>
    %104 = vector.shape_cast %103 : vector<256xf32> to vector<1x256xf32>
    %105 = math.log %104 : vector<1x256xf32>
    %106 = arith.addf %99, %105 : vector<1x256xf32>
    %107 = arith.mulf %14, %97 : vector<21x256xf32>
    %cst_49 = arith.constant dense<0.000000e+00> : vector<256xf32>
    %108 = vector.multi_reduction <add>, %107, %cst_49 [0] : vector<21x256xf32> to vector<256xf32>
    %109 = vector.shape_cast %108 : vector<256xf32> to vector<1x256xf32>
    %c4 = arith.constant 4 : index
    %c0_50 = arith.constant 0 : index
    %110 = vector.load %arg12[%c4, %c0_50] : memref<8x256xf32, #tpu.memory_space<vmem>>, vector<1x256xf32>
    %111 = arith.subf %106, %109 : vector<1x256xf32>
    %112 = arith.mulf %19, %111 : vector<1x256xf32>
    %113 = arith.addf %110, %112 : vector<1x256xf32>
    %c4_51 = arith.constant 4 : index
    %c0_52 = arith.constant 0 : index
    %114 = vector.load %arg12[%c4_51, %c0_52] : memref<8x256xf32, #tpu.memory_space<vmem>>, vector<1x256xf32>
    tpu.vector_store %arg12[%c4_51, %c0_52], %113 {strides = array<i32>} : memref<8x256xf32, #tpu.memory_space<vmem>>, vector<1x256xf32>,
    %c0_53 = arith.constant 0 : index
    %c0_54 = arith.constant 0 : index
    %c0_55 = arith.constant 0 : index
    %115 = vector.load %arg10[%c0_53, %c0_54, %c0_55] : memref<1x21x256xf32, #tpu.memory_space<vmem>>, vector<1x21x256xf32>
    %116 = vector.shape_cast %115 : vector<1x21x256xf32> to vector<21x256xf32>
    %cst_56 = arith.constant dense<0xFF800000> : vector<256xf32>
    %117 = vector.multi_reduction <maximumf>, %116, %cst_56 [0] : vector<21x256xf32> to vector<256xf32>
    %118 = vector.shape_cast %117 : vector<256xf32> to vector<1x256xf32>
    %119 = vector.broadcast %118 : vector<1x256xf32> to vector<21x256xf32>
    %120 = arith.subf %116, %119 : vector<21x256xf32>
    %121 = math.exp %120 : vector<21x256xf32>
    %cst_57 = arith.constant dense<0.000000e+00> : vector<256xf32>
    %122 = vector.multi_reduction <add>, %121, %cst_57 [0] : vector<21x256xf32> to vector<256xf32>
    %123 = vector.shape_cast %122 : vector<256xf32> to vector<1x256xf32>
    %124 = math.log %123 : vector<1x256xf32>
    %125 = arith.addf %118, %124 : vector<1x256xf32>
    %126 = arith.mulf %14, %116 : vector<21x256xf32>
    %cst_58 = arith.constant dense<0.000000e+00> : vector<256xf32>
    %127 = vector.multi_reduction <add>, %126, %cst_58 [0] : vector<21x256xf32> to vector<256xf32>
    %128 = vector.shape_cast %127 : vector<256xf32> to vector<1x256xf32>
    %c5 = arith.constant 5 : index
    %c0_59 = arith.constant 0 : index
    %129 = vector.load %arg12[%c5, %c0_59] : memref<8x256xf32, #tpu.memory_space<vmem>>, vector<1x256xf32>
    %130 = arith.subf %125, %128 : vector<1x256xf32>
    %131 = arith.mulf %19, %130 : vector<1x256xf32>
    %132 = arith.addf %129, %131 : vector<1x256xf32>
    %c5_60 = arith.constant 5 : index
    %c0_61 = arith.constant 0 : index
    %133 = vector.load %arg12[%c5_60, %c0_61] : memref<8x256xf32, #tpu.memory_space<vmem>>, vector<1x256xf32>
    tpu.vector_store %arg12[%c5_60, %c0_61], %132 {strides = array<i32>} : memref<8x256xf32, #tpu.memory_space<vmem>>, vector<1x256xf32>,
    %c6 = arith.constant 6 : index
    %c0_62 = arith.constant 0 : index
    %134 = vector.load %arg12[%c6, %c0_62] : memref<8x256xf32, #tpu.memory_space<vmem>>, vector<1x256xf32>
    %135 = arith.addf %134, %19 : vector<1x256xf32>
    %c6_63 = arith.constant 6 : index
    %c0_64 = arith.constant 0 : index
    %136 = vector.load %arg12[%c6_63, %c0_64] : memref<8x256xf32, #tpu.memory_space<vmem>>, vector<1x256xf32>
    tpu.vector_store %arg12[%c6_63, %c0_64], %135 {strides = array<i32>} : memref<8x256xf32, #tpu.memory_space<vmem>>, vector<1x256xf32>,
    %137 = arith.extui %5 : i1 to i32
    %c0_i32_65 = arith.constant 0 : i32
    %138 = arith.cmpi ne, %137, %c0_i32_65 : i32
    scf.if %138 {
      %c0_66 = arith.constant 0 : index
      %c0_67 = arith.constant 0 : index
      %139 = vector.load %arg12[%c0_66, %c0_67] : memref<8x256xf32, #tpu.memory_space<vmem>>, vector<8x256xf32>
      %140 = vector.shape_cast %139 : vector<8x256xf32> to vector<1x8x256xf32>
      %c0_68 = arith.constant 0 : index
      %c0_69 = arith.constant 0 : index
      %c0_70 = arith.constant 0 : index
      %141 = vector.load %arg11[%c0_68, %c0_69, %c0_70] : memref<1x8x256xf32, #tpu.memory_space<vmem>>, vector<1x8x256xf32>
      tpu.vector_store %arg11[%c0_68, %c0_69, %c0_70], %140 {strides = array<i32>} : memref<1x8x256xf32, #tpu.memory_space<vmem>>, vector<1x8x256xf32>,
    } else {
    }
    return
  }
  func.func @transform_0(%arg0: i32, %arg1: i32, %arg2: i32) -> (i32, i32) {
    %c0_i32 = arith.constant 0 : i32
    %c0_i32_0 = arith.constant 0 : i32
    %c0_i32_1 = arith.constant 0 : i32
    return %c0_i32, %c0_i32_0 : i32, i32
  }
  func.func @transform_1(%arg0: i32, %arg1: i32, %arg2: i32) -> (i32, i32, i32) {
    %c1_i32 = arith.constant 1 : i32
    %0 = arith.muli %arg0, %c1_i32 : i32
    %1 = arith.addi %0, %arg2 : i32
    %c0_i32 = arith.constant 0 : i32
    %c0_i32_0 = arith.constant 0 : i32
    return %arg1, %c0_i32, %1 : i32, i32, i32
  }
  func.func @transform_2(%arg0: i32, %arg1: i32, %arg2: i32) -> (i32, i32, i32) {
    %c1_i32 = arith.constant 1 : i32
    %0 = arith.muli %arg0, %c1_i32 : i32
    %1 = arith.addi %0, %arg2 : i32
    %c0_i32 = arith.constant 0 : i32
    %c0_i32_0 = arith.constant 0 : i32
    return %arg1, %c0_i32, %1 : i32, i32, i32
  }
  func.func @transform_3(%arg0: i32, %arg1: i32, %arg2: i32) -> (i32, i32, i32) {
    %c1_i32 = arith.constant 1 : i32
    %0 = arith.muli %arg0, %c1_i32 : i32
    %1 = arith.addi %0, %arg2 : i32
    %c0_i32 = arith.constant 0 : i32
    %c0_i32_0 = arith.constant 0 : i32
    return %arg1, %c0_i32, %1 : i32, i32, i32
  }
  func.func @transform_4(%arg0: i32, %arg1: i32, %arg2: i32) -> (i32, i32, i32) {
    %c1_i32 = arith.constant 1 : i32
    %0 = arith.muli %arg0, %c1_i32 : i32
    %1 = arith.addi %0, %arg2 : i32
    %c0_i32 = arith.constant 0 : i32
    %c0_i32_0 = arith.constant 0 : i32
    return %arg1, %c0_i32, %1 : i32, i32, i32
  }
  func.func @transform_5(%arg0: i32, %arg1: i32, %arg2: i32) -> (i32, i32, i32) {
    %c1_i32 = arith.constant 1 : i32
    %0 = arith.muli %arg0, %c1_i32 : i32
    %1 = arith.addi %0, %arg2 : i32
    %c0_i32 = arith.constant 0 : i32
    %c0_i32_0 = arith.constant 0 : i32
    return %arg1, %c0_i32, %1 : i32, i32, i32
  }
  func.func @transform_6(%arg0: i32, %arg1: i32, %arg2: i32) -> (i32, i32, i32) {
    %c1_i32 = arith.constant 1 : i32
    %0 = arith.muli %arg0, %c1_i32 : i32
    %1 = arith.addi %0, %arg2 : i32
    %c0_i32 = arith.constant 0 : i32
    %c0_i32_0 = arith.constant 0 : i32
    return %arg1, %c0_i32, %1 : i32, i32, i32
  }
  func.func @transform_7(%arg0: i32, %arg1: i32, %arg2: i32) -> (i32, i32, i32) {
    %c1_i32 = arith.constant 1 : i32
    %0 = arith.muli %arg0, %c1_i32 : i32
    %1 = arith.addi %0, %arg2 : i32
    %c0_i32 = arith.constant 0 : i32
    %c0_i32_0 = arith.constant 0 : i32
    return %arg1, %c0_i32, %1 : i32, i32, i32
  }
  func.func @transform_8(%arg0: i32, %arg1: i32, %arg2: i32) -> (i32, i32, i32) {
    %c0_i32 = arith.constant 0 : i32
    %c0_i32_0 = arith.constant 0 : i32
    %c0_i32_1 = arith.constant 0 : i32
    return %arg0, %c0_i32, %c0_i32_0 : i32, i32, i32
  }
}

</mosaic_0001>

<llo_original>
// kernel: tpu_custom_call.1
$region0: #{tpu_custom_call.1}
  #allocation0 [shape = 'u32[]', space=smem, size = 0x4, offset = 0x4, fixed_abs, tag = 'smem constant byte address 0x4 - core index']
  #allocation1 [shape = 'u32[144,128]{1,0:T(1,128)}', space=vmem, size = 0x12000, scoped, tag = 'internal scratch']
  #allocation2 [shape = 'f32[8,256]{1,0:T(8,128)}', space=vmem, size = 0x2000, scoped, tag = 'scratch operand']
  %s0 = inlined_call_operand.vmem [shape: f32[21,1], index: 0, kind: input, shape index: {}]
  %s1 = inlined_call_operand.vmem [shape: s32[2,1,512], index: 1, kind: input, shape index: {}]
  %s2 = inlined_call_operand.vmem [shape: f32[2,21,512], index: 2, kind: input, shape index: {}]
  %s3 = inlined_call_operand.vmem [shape: f32[2,21,512], index: 3, kind: input, shape index: {}]
  %s4 = inlined_call_operand.vmem [shape: f32[2,21,512], index: 4, kind: input, shape index: {}]
  %s5 = inlined_call_operand.vmem [shape: f32[2,21,512], index: 5, kind: input, shape index: {}]
  %s6 = inlined_call_operand.vmem [shape: f32[2,21,512], index: 6, kind: input, shape index: {}]
  %s7 = inlined_call_operand.vmem [shape: f32[2,21,512], index: 7, kind: input, shape index: {}]
  %s8 = inlined_call_operand.hbm [shape: f32[2,8,256], index: 8, kind: output, shape index: {}]
  %s9 = sld [smem:[#allocation0]]
  $region211: #{tpu_custom_call.1} parent=0
    _
  %s11 = ssub.s32 1, %s9
  %s12 = scalar_select 0, %s11, %s9
  $region1: #{tpu_custom_call.1} parent=0
    #allocation3 [shape = 'u8[49152]{0}', space=vmem, size = 0xc000, scoped, tag = 'input window, operand 2']
    #allocation4 [shape = 'u8[49152]{0}', space=vmem, size = 0xc000, scoped, tag = 'input window, operand 3']
    #allocation5 [shape = 'u8[49152]{0}', space=vmem, size = 0xc000, scoped, tag = 'input window, operand 4']
    #allocation6 [shape = 'u8[49152]{0}', space=vmem, size = 0xc000, scoped, tag = 'input window, operand 5']
    #allocation7 [shape = 'u8[49152]{0}', space=vmem, size = 0xc000, scoped, tag = 'input window, operand 6']
    #allocation8 [shape = 'u8[49152]{0}', space=vmem, size = 0xc000, scoped, tag = 'input window, operand 7']
    #allocation9 [shape = 'u8[16384]{0}', space=vmem, size = 0x4000, scoped, tag = 'output window, operand 0']
    #allocation10 [shape = 's32[2]{0}', space=sflag, size = 0x8, scoped, tag = 'scoped memory for tpu_custom_call.1']
    %13 = vsyncpa [#allocation10], 0
    %s14 = scalar_lea.sflag [#allocation10], 1
    %15 = vsyncpa %s14, 0
    loop: start=0, step=1, limit=6
    $region2: #{tpu_custom_call.1} parent=1 // loop_pre_header
      _
    $region3: #{tpu_custom_call.1} parent=1 // loop_header
      %s17 = sphi 0, %s21
      %p18 = scmp.ge.s32.totalorder %s17, 6
      %s24 = sphi 0, %s43
      %s25 = sphi 0, %s39
      %s26 = sphi 0, %s35
      %s27 = sphi 0, %s24
      %s28 = sphi 0, %s25
      %s29 = sphi 0, %s26
      %s30 = sphi 0, %s27
      %s31 = sphi 0, %s28
      %s32 = sphi 0, %s29
      %s44 = sphi 0, %s44
      %s46 = sphi 0, %s44
      %s47 = sphi 0, %s46
      %s61 = sphi 0, %s47
      %s71 = sphi 0, %s73
      %s74 = sphi 0, %s71
      %s75 = sphi 0, %s74
      %s91 = sphi 0, %s75
      %s101 = sphi 0, %s103
      %s104 = sphi 0, %s101
      %s105 = sphi 0, %s104
      %s121 = sphi 0, %s105
      %s131 = sphi 0, %s133
      %s134 = sphi 0, %s131
      %s135 = sphi 0, %s134
      %s151 = sphi 0, %s135
      %s161 = sphi 0, %s163
      %s164 = sphi 0, %s161
      %s165 = sphi 0, %s164
      %s181 = sphi 0, %s165
      %s191 = sphi 0, %s193
      %s194 = sphi 0, %s191
      %s195 = sphi 0, %s194
      %s211 = sphi 0, %s195
      %s221 = sphi 0, %s223
      %s224 = sphi 0, %s221
      %s225 = sphi 0, %s224
      %s241 = sphi 0, %s225
      %s251 = sphi 0, %s253
      %s254 = sphi 0, %s251
      %s255 = sphi 0, %s254
      %s271 = sphi 0, %s255
      %s277 = sphi 0, %s279
      %s280 = sphi 0, %s277
      %s281 = sphi 0, %s280
      %s297 = sphi 0, %s281
    $region4: #{tpu_custom_call.1} parent=1 // loop_header_branch
      %20 = sbr.rel (%p18) target = $region8
    $region5: #{tpu_custom_call.1} parent=1 // loop_body
      %s22 = ssub.s32 %s17, 1
      %s23 = ssub.s32 %s17, 2
      %s33 = sadd.s32 1, %s26
      %p34 = scmp.ge.s32.totalorder %s33, 1
      %s35 = scalar_select %p34, 0, %s33
      %s36 = sadd.s32 1, %s25
      %s37 = scalar_select %p34, %s36, %s25
      %p38 = scmp.ge.s32.totalorder %s37, 2
      %s39 = scalar_select %p38, 0, %s37
      %s40 = sadd.s32 1, %s24
      %s41 = scalar_select %p38, %s40, %s24
      %p42 = scmp.ge.s32.totalorder %s41, 2
      %s43 = scalar_select %p42, 0, %s41
      %s45 = sadd.s32 %s44, 1
      %p48 = scmp.eq.s32.totalorder %s17, 3
      %p49 = scmp.ne.s32.totalorder %s44, %s46
      %p50 = scmp.eq.s32.totalorder %s17, 0
      %p51 = por %p49, %p50
      %p52 = scmp.ne.s32.totalorder %s44, %s46
      %p53 = scmp.eq.s32.totalorder %s22, 3
      %p54 = por %p52, %p53
      %p55 = scmp.ne.s32.totalorder %s46, %s47
      %p56 = scmp.eq.s32.totalorder %s22, 0
      %p57 = por %p55, %p56
      %p58 = scmp.ne.s32.totalorder %s46, %s47
      %p59 = scmp.eq.s32.totalorder %s23, 3
      %p60 = por %p58, %p59
      %p62 = scmp.ne.s32.totalorder %s47, %s61
      %p63 = scmp.eq.s32.totalorder %s23, 0
      %p64 = por %p62, %p63
      %s65 = sadd.s32 %s24, %s26
      %s66 = sadd.s32 %s43, %s35
      %s67 = ssub.s32 %s25, %s39
      %s68 = ssub.s32 %s65, %s66
      %s69 = sor.u32 %s67, %s68
      %p70 = scmp.eq.s32.totalorder %s69, 0
      %s72 = sadd.s32 %s71, 1
      %s73 = scalar_select %p70, %s71, %s72
      %p76 = pneg %p70
      %p77 = scmp.eq.s32.totalorder %s17, 3
      %p78 = por %p76, %p77
      %p79 = scmp.ne.s32.totalorder %s71, %s74
      %p80 = scmp.eq.s32.totalorder %s17, 0
      %p81 = por %p79, %p80
      %p82 = scmp.ne.s32.totalorder %s71, %s74
      %p83 = scmp.eq.s32.totalorder %s22, 3
      %p84 = por %p82, %p83
      %p85 = scmp.ne.s32.totalorder %s74, %s75
      %p86 = scmp.eq.s32.totalorder %s22, 0
      %p87 = por %p85, %p86
      %p88 = scmp.ne.s32.totalorder %s74, %s75
      %p89 = scmp.eq.s32.totalorder %s23, 3
      %p90 = por %p88, %p89
      %p92 = scmp.ne.s32.totalorder %s75, %s91
      %p93 = scmp.eq.s32.totalorder %s23, 0
      %p94 = por %p92, %p93
      %s95 = sadd.s32 %s24, %s26
      %s96 = sadd.s32 %s43, %s35
      %s97 = ssub.s32 %s25, %s39
      %s98 = ssub.s32 %s95, %s96
      %s99 = sor.u32 %s97, %s98
      %p100 = scmp.eq.s32.totalorder %s99, 0
      %s102 = sadd.s32 %s101, 1
      %s103 = scalar_select %p100, %s101, %s102
      %p106 = pneg %p100
      %p107 = scmp.eq.s32.totalorder %s17, 3
      %p108 = por %p106, %p107
      %p109 = scmp.ne.s32.totalorder %s101, %s104
      %p110 = scmp.eq.s32.totalorder %s17, 0
      %p111 = por %p109, %p110
      %p112 = scmp.ne.s32.totalorder %s101, %s104
      %p113 = scmp.eq.s32.totalorder %s22, 3
      %p114 = por %p112, %p113
      %p115 = scmp.ne.s32.totalorder %s104, %s105
      %p116 = scmp.eq.s32.totalorder %s22, 0
      %p117 = por %p115, %p116
      %p118 = scmp.ne.s32.totalorder %s104, %s105
      %p119 = scmp.eq.s32.totalorder %s23, 3
      %p120 = por %p118, %p119
      %p122 = scmp.ne.s32.totalorder %s105, %s121
      %p123 = scmp.eq.s32.totalorder %s23, 0
      %p124 = por %p122, %p123
      %s125 = sadd.s32 %s24, %s26
      %s126 = sadd.s32 %s43, %s35
      %s127 = ssub.s32 %s25, %s39
      %s128 = ssub.s32 %s125, %s126
      %s129 = sor.u32 %s127, %s128
      %p130 = scmp.eq.s32.totalorder %s129, 0
      %s132 = sadd.s32 %s131, 1
      %s133 = scalar_select %p130, %s131, %s132
      %p136 = pneg %p130
      %p137 = scmp.eq.s32.totalorder %s17, 3
      %p138 = por %p136, %p137
      %p139 = scmp.ne.s32.totalorder %s131, %s134
      %p140 = scmp.eq.s32.totalorder %s17, 0
      %p141 = por %p139, %p140
      %p142 = scmp.ne.s32.totalorder %s131, %s134
      %p143 = scmp.eq.s32.totalorder %s22, 3
      %p144 = por %p142, %p143
      %p145 = scmp.ne.s32.totalorder %s134, %s135
      %p146 = scmp.eq.s32.totalorder %s22, 0
      %p147 = por %p145, %p146
      %p148 = scmp.ne.s32.totalorder %s134, %s135
      %p149 = scmp.eq.s32.totalorder %s23, 3
      %p150 = por %p148, %p149
      %p152 = scmp.ne.s32.totalorder %s135, %s151
      %p153 = scmp.eq.s32.totalorder %s23, 0
      %p154 = por %p152, %p153
      %s155 = sadd.s32 %s24, %s26
      %s156 = sadd.s32 %s43, %s35
      %s157 = ssub.s32 %s25, %s39
      %s158 = ssub.s32 %s155, %s156
      %s159 = sor.u32 %s157, %s158
      %p160 = scmp.eq.s32.totalorder %s159, 0
      %s162 = sadd.s32 %s161, 1
      %s163 = scalar_select %p160, %s161, %s162
      %p166 = pneg %p160
      %p167 = scmp.eq.s32.totalorder %s17, 3
      %p168 = por %p166, %p167
      %p169 = scmp.ne.s32.totalorder %s161, %s164
      %p170 = scmp.eq.s32.totalorder %s17, 0
      %p171 = por %p169, %p170
      %p172 = scmp.ne.s32.totalorder %s161, %s164
      %p173 = scmp.eq.s32.totalorder %s22, 3
      %p174 = por %p172, %p173
      %p175 = scmp.ne.s32.totalorder %s164, %s165
      %p176 = scmp.eq.s32.totalorder %s22, 0
      %p177 = por %p175, %p176
      %p178 = scmp.ne.s32.totalorder %s164, %s165
      %p179 = scmp.eq.s32.totalorder %s23, 3
      %p180 = por %p178, %p179
      %p182 = scmp.ne.s32.totalorder %s165, %s181
      %p183 = scmp.eq.s32.totalorder %s23, 0
      %p184 = por %p182, %p183
      %s185 = sadd.s32 %s24, %s26
      %s186 = sadd.s32 %s43, %s35
      %s187 = ssub.s32 %s25, %s39
      %s188 = ssub.s32 %s185, %s186
      %s189 = sor.u32 %s187, %s188
      %p190 = scmp.eq.s32.totalorder %s189, 0
      %s192 = sadd.s32 %s191, 1
      %s193 = scalar_select %p190, %s191, %s192
      %p196 = pneg %p190
      %p197 = scmp.eq.s32.totalorder %s17, 3
      %p198 = por %p196, %p197
      %p199 = scmp.ne.s32.totalorder %s191, %s194
      %p200 = scmp.eq.s32.totalorder %s17, 0
      %p201 = por %p199, %p200
      %p202 = scmp.ne.s32.totalorder %s191, %s194
      %p203 = scmp.eq.s32.totalorder %s22, 3
      %p204 = por %p202, %p203
      %p205 = scmp.ne.s32.totalorder %s194, %s195
      %p206 = scmp.eq.s32.totalorder %s22, 0
      %p207 = por %p205, %p206
      %p208 = scmp.ne.s32.totalorder %s194, %s195
      %p209 = scmp.eq.s32.totalorder %s23, 3
      %p210 = por %p208, %p209
      %p212 = scmp.ne.s32.totalorder %s195, %s211
      %p213 = scmp.eq.s32.totalorder %s23, 0
      %p214 = por %p212, %p213
      %s215 = sadd.s32 %s24, %s26
      %s216 = sadd.s32 %s43, %s35
      %s217 = ssub.s32 %s25, %s39
      %s218 = ssub.s32 %s215, %s216
      %s219 = sor.u32 %s217, %s218
      %p220 = scmp.eq.s32.totalorder %s219, 0
      %s222 = sadd.s32 %s221, 1
      %s223 = scalar_select %p220, %s221, %s222
      %p226 = pneg %p220
      %p227 = scmp.eq.s32.totalorder %s17, 3
      %p228 = por %p226, %p227
      %p229 = scmp.ne.s32.totalorder %s221, %s224
      %p230 = scmp.eq.s32.totalorder %s17, 0
      %p231 = por %p229, %p230
      %p232 = scmp.ne.s32.totalorder %s221, %s224
      %p233 = scmp.eq.s32.totalorder %s22, 3
      %p234 = por %p232, %p233
      %p235 = scmp.ne.s32.totalorder %s224, %s225
      %p236 = scmp.eq.s32.totalorder %s22, 0
      %p237 = por %p235, %p236
      %p238 = scmp.ne.s32.totalorder %s224, %s225
      %p239 = scmp.eq.s32.totalorder %s23, 3
      %p240 = por %p238, %p239
      %p242 = scmp.ne.s32.totalorder %s225, %s241
      %p243 = scmp.eq.s32.totalorder %s23, 0
      %p244 = por %p242, %p243
      %s245 = sadd.s32 %s24, %s26
      %s246 = sadd.s32 %s43, %s35
      %s247 = ssub.s32 %s25, %s39
      %s248 = ssub.s32 %s245, %s246
      %s249 = sor.u32 %s247, %s248
      %p250 = scmp.eq.s32.totalorder %s249, 0
      %s252 = sadd.s32 %s251, 1
      %s253 = scalar_select %p250, %s251, %s252
      %p256 = pneg %p250
      %p257 = scmp.eq.s32.totalorder %s17, 3
      %p258 = por %p256, %p257
      %p259 = scmp.ne.s32.totalorder %s251, %s254
      %p260 = scmp.eq.s32.totalorder %s17, 0
      %p261 = por %p259, %p260
      %p262 = scmp.ne.s32.totalorder %s251, %s254
      %p263 = scmp.eq.s32.totalorder %s22, 3
      %p264 = por %p262, %p263
      %p265 = scmp.ne.s32.totalorder %s254, %s255
      %p266 = scmp.eq.s32.totalorder %s22, 0
      %p267 = por %p265, %p266
      %p268 = scmp.ne.s32.totalorder %s254, %s255
      %p269 = scmp.eq.s32.totalorder %s23, 3
      %p270 = por %p268, %p269
      %p272 = scmp.ne.s32.totalorder %s255, %s271
      %p273 = scmp.eq.s32.totalorder %s23, 0
      %p274 = por %p272, %p273
      %s275 = ssub.s32 %s24, %s43
      %p276 = scmp.eq.s32.totalorder %s275, 0
      %s278 = sadd.s32 %s277, 1
      %s279 = scalar_select %p276, %s277, %s278
      %p282 = pneg %p276
      %p283 = scmp.eq.s32.totalorder %s17, 3
      %p284 = por %p282, %p283
      %p285 = scmp.ne.s32.totalorder %s277, %s280
      %p286 = scmp.eq.s32.totalorder %s17, 0
      %p287 = por %p285, %p286
      %p288 = scmp.ne.s32.totalorder %s277, %s280
      %p289 = scmp.eq.s32.totalorder %s22, 3
      %p290 = por %p288, %p289
      %p291 = scmp.ne.s32.totalorder %s280, %s281
      %p292 = scmp.eq.s32.totalorder %s22, 0
      %p293 = por %p291, %p292
      %p294 = scmp.ne.s32.totalorder %s280, %s281
      %p295 = scmp.eq.s32.totalorder %s23, 3
      %p296 = por %p294, %p295
      %p298 = scmp.ne.s32.totalorder %s281, %s297
      %p299 = scmp.eq.s32.totalorder %s23, 0
      %p300 = por %p298, %p299
      %p301 = scmp.le.s32.totalorder 1, %s17
      %p302 = scmp.lt.s32.totalorder %s17, 5
      %p303 = pnand %p301, %p302
      %p304 = pneg %p303
      // Predicated region
      $region9: #{tpu_custom_call.1} parent=5 // pred_check
        _
      $region10: #{tpu_custom_call.1} parent=5 // pred_check_branch
        %306 = sbr.rel (%p303) target = $region12
      $region11: #{tpu_custom_call.1} parent=5 // pred_region
        %s307 = ssub.s32 %s17, 1
        // Predicated region
        $region13: #{tpu_custom_call.1} parent=11 // pred_check
          %p308 = pneg %p57
        $region14: #{tpu_custom_call.1} parent=11 // pred_check_branch
          %310 = sbr.rel (%p308) target = $region16
        $region15: #{tpu_custom_call.1} parent=11 // pred_region
          _
        $region16: #{tpu_custom_call.1} parent=11 // pred_fallthru
          _
      $region12: #{tpu_custom_call.1} parent=5 // pred_fallthru
        _
      %p311 = scmp.lt.s32.totalorder %s17, 4
      // Predicated region
      $region17: #{tpu_custom_call.1} parent=5 // pred_check
        %p312 = pneg %p311
      $region18: #{tpu_custom_call.1} parent=5 // pred_check_branch
        %314 = sbr.rel (%p312) target = $region20
      $region19: #{tpu_custom_call.1} parent=5 // pred_region
        // Predicated region
        $region21: #{tpu_custom_call.1} parent=19 // pred_check
          %p315 = pneg %p81
        $region22: #{tpu_custom_call.1} parent=19 // pred_check_branch
          %317 = sbr.rel (%p315) target = $region24
        $region23: #{tpu_custom_call.1} parent=19 // pred_region
          %s318 = sadd.s32 %s24, %s26
          %s319 = smul.u32 2, %s318
          %p320 = scmp.lt.s32.totalorder %s25, 1
          %s321 = scalar_select %p320, %s25, 1
          %p322 = scmp.lt.s32.totalorder %s319, 3
          %s323 = scalar_select %p322, %s319, 3
          %s324 = smul.addr %s321, 4
          %s325 = sadd.s32 %s323, %s324
          %s326 = scalar_lea.vmem %s1, %s325
          %s327 = sadd.s32 %s24, %s26
          %s328 = smul.u32 2, %s327
        $region24: #{tpu_custom_call.1} parent=19 // pred_fallthru
          _
        // Predicated region
        $region25: #{tpu_custom_call.1} parent=19 // pred_check
          %p329 = pneg %p111
        $region26: #{tpu_custom_call.1} parent=19 // pred_check_branch
          %331 = sbr.rel (%p329) target = $region28
        $region27: #{tpu_custom_call.1} parent=19 // pred_region
          %s332 = sand.u32 %s101, 1
          %s333 = sand.u32 %s101, 1
          %s334 = smul.addr %s333, 48
          %s335 = scalar_lea.vmem [#allocation3], %s334
          %s336 = sadd.s32 %s24, %s26
          %s337 = smul.u32 2, %s336
          %s338 = smul.addr %s25, 12
          %s339 = sadd.s32 %s337, %s338
          %s340 = smul.addr %s339, 8
          %s341 = scalar_lea.vmem %s2, %s340
          // Predicated region
          $region29: #{tpu_custom_call.1} parent=27 // pred_check
            _
          $region30: #{tpu_custom_call.1} parent=27 // pred_check_branch
            %343 = sbr.rel (0) target = $region32
          $region31: #{tpu_custom_call.1} parent=27 // pred_region
            // Predicated region
            $region33: #{tpu_custom_call.1} parent=31 // pred_check
              _
            $region34: #{tpu_custom_call.1} parent=31 // pred_check_branch
              %345 = sbr.rel (0) target = $region36
            $region35: #{tpu_custom_call.1} parent=31 // pred_region
              loop: start=0, step=1, limit=1
              $region37: #{tpu_custom_call.1} parent=35 // loop_pre_header
                _
              $region38: #{tpu_custom_call.1} parent=35 // loop_header
                %s347 = sphi 0, %s351
                %p348 = scmp.ge.s32.totalorder %s347, 1
                %s352 = sphi %s341, %s341
                %s353 = sphi %s335, %s335
              $region39: #{tpu_custom_call.1} parent=35 // loop_header_branch
                %350 = sbr.rel (%p348) target = $region43
              $region40: #{tpu_custom_call.1} parent=35 // loop_body
                %v354 = vld [vmem:[%s352] sm:$0xff]
                %355 = vst [vmem:[%s353] sm:$0xff] %v354
                %v356 = vld [vmem:[%s352 + $0x8] sm:$0xff]
                %357 = vst [vmem:[%s353 + $0x8] sm:$0xff] %v356
                %v358 = vld [vmem:[%s352 + $0x20] sm:$0xff]
                %359 = vst [vmem:[%s353 + $0x10] sm:$0xff] %v358
                %v360 = vld [vmem:[%s352 + $0x28] sm:$0xff]
                %361 = vst [vmem:[%s353 + $0x18] sm:$0xff] %v360
                %v362 = vld [vmem:[%s352 + $0x40] sm:$0xff]
                %363 = vst [vmem:[%s353 + $0x20] sm:$0xff] %v362
                %v364 = vld [vmem:[%s352 + $0x48] sm:$0xff]
                %365 = vst [vmem:[%s353 + $0x28] sm:$0xff] %v364
              $region41: #{tpu_custom_call.1} parent=35 // loop_footer
                %s351 = sadd.s32 1, %s347
              $region42: #{tpu_custom_call.1} parent=35 // loop_footer_branch
                %346 = sbr.rel target = $region38
              $region43: #{tpu_custom_call.1} parent=35 // loop_exit
                _
            $region36: #{tpu_custom_call.1} parent=31 // pred_fallthru
              _
            // Predicated region
            $region44: #{tpu_custom_call.1} parent=31 // pred_check
              _
            $region45: #{tpu_custom_call.1} parent=31 // pred_check_branch
              %367 = sbr.rel target = $region47
            $region46: #{tpu_custom_call.1} parent=31 // pred_region
              _
            $region47: #{tpu_custom_call.1} parent=31 // pred_fallthru
              _
          $region32: #{tpu_custom_call.1} parent=27 // pred_fallthru
            _
          %368 = vnop
        $region28: #{tpu_custom_call.1} parent=19 // pred_fallthru
          _
        // Predicated region
        $region48: #{tpu_custom_call.1} parent=19 // pred_check
          %p369 = pneg %p141
        $region49: #{tpu_custom_call.1} parent=19 // pred_check_branch
          %371 = sbr.rel (%p369) target = $region51
        $region50: #{tpu_custom_call.1} parent=19 // pred_region
          %s372 = sand.u32 %s131, 1
          %s373 = sand.u32 %s131, 1
          %s374 = smul.addr %s373, 48
          %s375 = scalar_lea.vmem [#allocation4], %s374
          %s376 = sadd.s32 %s24, %s26
          %s377 = smul.u32 2, %s376
          %s378 = smul.addr %s25, 12
          %s379 = sadd.s32 %s377, %s378
          %s380 = smul.addr %s379, 8
          %s381 = scalar_lea.vmem %s3, %s380
          // Predicated region
          $region52: #{tpu_custom_call.1} parent=50 // pred_check
            _
          $region53: #{tpu_custom_call.1} parent=50 // pred_check_branch
            %383 = sbr.rel (0) target = $region55
          $region54: #{tpu_custom_call.1} parent=50 // pred_region
            // Predicated region
            $region56: #{tpu_custom_call.1} parent=54 // pred_check
              _
            $region57: #{tpu_custom_call.1} parent=54 // pred_check_branch
              %385 = sbr.rel (0) target = $region59
            $region58: #{tpu_custom_call.1} parent=54 // pred_region
              loop: start=0, step=1, limit=1
              $region60: #{tpu_custom_call.1} parent=58 // loop_pre_header
                _
              $region61: #{tpu_custom_call.1} parent=58 // loop_header
                %s387 = sphi 0, %s391
                %p388 = scmp.ge.s32.totalorder %s387, 1
                %s392 = sphi %s381, %s381
                %s393 = sphi %s375, %s375
              $region62: #{tpu_custom_call.1} parent=58 // loop_header_branch
                %390 = sbr.rel (%p388) target = $region66
              $region63: #{tpu_custom_call.1} parent=58 // loop_body
                %v394 = vld [vmem:[%s392] sm:$0xff]
                %395 = vst [vmem:[%s393] sm:$0xff] %v394
                %v396 = vld [vmem:[%s392 + $0x8] sm:$0xff]
                %397 = vst [vmem:[%s393 + $0x8] sm:$0xff] %v396
                %v398 = vld [vmem:[%s392 + $0x20] sm:$0xff]
                %399 = vst [vmem:[%s393 + $0x10] sm:$0xff] %v398
                %v400 = vld [vmem:[%s392 + $0x28] sm:$0xff]
                %401 = vst [vmem:[%s393 + $0x18] sm:$0xff] %v400
                %v402 = vld [vmem:[%s392 + $0x40] sm:$0xff]
                %403 = vst [vmem:[%s393 + $0x20] sm:$0xff] %v402
                %v404 = vld [vmem:[%s392 + $0x48] sm:$0xff]
                %405 = vst [vmem:[%s393 + $0x28] sm:$0xff] %v404
              $region64: #{tpu_custom_call.1} parent=58 // loop_footer
                %s391 = sadd.s32 1, %s387
              $region65: #{tpu_custom_call.1} parent=58 // loop_footer_branch
                %386 = sbr.rel target = $region61
              $region66: #{tpu_custom_call.1} parent=58 // loop_exit
                _
            $region59: #{tpu_custom_call.1} parent=54 // pred_fallthru
              _
            // Predicated region
            $region67: #{tpu_custom_call.1} parent=54 // pred_check
              _
            $region68: #{tpu_custom_call.1} parent=54 // pred_check_branch
              %407 = sbr.rel target = $region70
            $region69: #{tpu_custom_call.1} parent=54 // pred_region
              _
            $region70: #{tpu_custom_call.1} parent=54 // pred_fallthru
              _
          $region55: #{tpu_custom_call.1} parent=50 // pred_fallthru
            _
          %408 = vnop
        $region51: #{tpu_custom_call.1} parent=19 // pred_fallthru
          _
        // Predicated region
        $region71: #{tpu_custom_call.1} parent=19 // pred_check
          %p409 = pneg %p171
        $region72: #{tpu_custom_call.1} parent=19 // pred_check_branch
          %411 = sbr.rel (%p409) target = $region74
        $region73: #{tpu_custom_call.1} parent=19 // pred_region
          %s412 = sand.u32 %s161, 1
          %s413 = sand.u32 %s161, 1
          %s414 = smul.addr %s413, 48
          %s415 = scalar_lea.vmem [#allocation5], %s414
          %s416 = sadd.s32 %s24, %s26
          %s417 = smul.u32 2, %s416
          %s418 = smul.addr %s25, 12
          %s419 = sadd.s32 %s417, %s418
          %s420 = smul.addr %s419, 8
          %s421 = scalar_lea.vmem %s4, %s420
          // Predicated region
          $region75: #{tpu_custom_call.1} parent=73 // pred_check
            _
          $region76: #{tpu_custom_call.1} parent=73 // pred_check_branch
            %423 = sbr.rel (0) target = $region78
          $region77: #{tpu_custom_call.1} parent=73 // pred_region
            // Predicated region
            $region79: #{tpu_custom_call.1} parent=77 // pred_check
              _
            $region80: #{tpu_custom_call.1} parent=77 // pred_check_branch
              %425 = sbr.rel (0) target = $region82
            $region81: #{tpu_custom_call.1} parent=77 // pred_region
              loop: start=0, step=1, limit=1
              $region83: #{tpu_custom_call.1} parent=81 // loop_pre_header
                _
              $region84: #{tpu_custom_call.1} parent=81 // loop_header
                %s427 = sphi 0, %s431
                %p428 = scmp.ge.s32.totalorder %s427, 1
                %s432 = sphi %s421, %s421
                %s433 = sphi %s415, %s415
              $region85: #{tpu_custom_call.1} parent=81 // loop_header_branch
                %430 = sbr.rel (%p428) target = $region89
              $region86: #{tpu_custom_call.1} parent=81 // loop_body
                %v434 = vld [vmem:[%s432] sm:$0xff]
                %435 = vst [vmem:[%s433] sm:$0xff] %v434
                %v436 = vld [vmem:[%s432 + $0x8] sm:$0xff]
                %437 = vst [vmem:[%s433 + $0x8] sm:$0xff] %v436
                %v438 = vld [vmem:[%s432 + $0x20] sm:$0xff]
                %439 = vst [vmem:[%s433 + $0x10] sm:$0xff] %v438
                %v440 = vld [vmem:[%s432 + $0x28] sm:$0xff]
                %441 = vst [vmem:[%s433 + $0x18] sm:$0xff] %v440
                %v442 = vld [vmem:[%s432 + $0x40] sm:$0xff]
                %443 = vst [vmem:[%s433 + $0x20] sm:$0xff] %v442
                %v444 = vld [vmem:[%s432 + $0x48] sm:$0xff]
                %445 = vst [vmem:[%s433 + $0x28] sm:$0xff] %v444
              $region87: #{tpu_custom_call.1} parent=81 // loop_footer
                %s431 = sadd.s32 1, %s427
              $region88: #{tpu_custom_call.1} parent=81 // loop_footer_branch
                %426 = sbr.rel target = $region84
              $region89: #{tpu_custom_call.1} parent=81 // loop_exit
                _
            $region82: #{tpu_custom_call.1} parent=77 // pred_fallthru
              _
            // Predicated region
            $region90: #{tpu_custom_call.1} parent=77 // pred_check
              _
            $region91: #{tpu_custom_call.1} parent=77 // pred_check_branch
              %447 = sbr.rel target = $region93
            $region92: #{tpu_custom_call.1} parent=77 // pred_region
              _
            $region93: #{tpu_custom_call.1} parent=77 // pred_fallthru
              _
          $region78: #{tpu_custom_call.1} parent=73 // pred_fallthru
            _
          %448 = vnop
        $region74: #{tpu_custom_call.1} parent=19 // pred_fallthru
          _
        // Predicated region
        $region94: #{tpu_custom_call.1} parent=19 // pred_check
          %p449 = pneg %p201
        $region95: #{tpu_custom_call.1} parent=19 // pred_check_branch
          %451 = sbr.rel (%p449) target = $region97
        $region96: #{tpu_custom_call.1} parent=19 // pred_region
          %s452 = sand.u32 %s191, 1
          %s453 = sand.u32 %s191, 1
          %s454 = smul.addr %s453, 48
          %s455 = scalar_lea.vmem [#allocation6], %s454
          %s456 = sadd.s32 %s24, %s26
          %s457 = smul.u32 2, %s456
          %s458 = smul.addr %s25, 12
          %s459 = sadd.s32 %s457, %s458
          %s460 = smul.addr %s459, 8
          %s461 = scalar_lea.vmem %s5, %s460
          // Predicated region
          $region98: #{tpu_custom_call.1} parent=96 // pred_check
            _
          $region99: #{tpu_custom_call.1} parent=96 // pred_check_branch
            %463 = sbr.rel (0) target = $region101
          $region100: #{tpu_custom_call.1} parent=96 // pred_region
            // Predicated region
            $region102: #{tpu_custom_call.1} parent=100 // pred_check
              _
            $region103: #{tpu_custom_call.1} parent=100 // pred_check_branch
              %465 = sbr.rel (0) target = $region105
            $region104: #{tpu_custom_call.1} parent=100 // pred_region
              loop: start=0, step=1, limit=1
              $region106: #{tpu_custom_call.1} parent=104 // loop_pre_header
                _
              $region107: #{tpu_custom_call.1} parent=104 // loop_header
                %s467 = sphi 0, %s471
                %p468 = scmp.ge.s32.totalorder %s467, 1
                %s472 = sphi %s461, %s461
                %s473 = sphi %s455, %s455
              $region108: #{tpu_custom_call.1} parent=104 // loop_header_branch
                %470 = sbr.rel (%p468) target = $region112
              $region109: #{tpu_custom_call.1} parent=104 // loop_body
                %v474 = vld [vmem:[%s472] sm:$0xff]
                %475 = vst [vmem:[%s473] sm:$0xff] %v474
                %v476 = vld [vmem:[%s472 + $0x8] sm:$0xff]
                %477 = vst [vmem:[%s473 + $0x8] sm:$0xff] %v476
                %v478 = vld [vmem:[%s472 + $0x20] sm:$0xff]
                %479 = vst [vmem:[%s473 + $0x10] sm:$0xff] %v478
                %v480 = vld [vmem:[%s472 + $0x28] sm:$0xff]
                %481 = vst [vmem:[%s473 + $0x18] sm:$0xff] %v480
                %v482 = vld [vmem:[%s472 + $0x40] sm:$0xff]
                %483 = vst [vmem:[%s473 + $0x20] sm:$0xff] %v482
                %v484 = vld [vmem:[%s472 + $0x48] sm:$0xff]
                %485 = vst [vmem:[%s473 + $0x28] sm:$0xff] %v484
              $region110: #{tpu_custom_call.1} parent=104 // loop_footer
                %s471 = sadd.s32 1, %s467
              $region111: #{tpu_custom_call.1} parent=104 // loop_footer_branch
                %466 = sbr.rel target = $region107
              $region112: #{tpu_custom_call.1} parent=104 // loop_exit
                _
            $region105: #{tpu_custom_call.1} parent=100 // pred_fallthru
              _
            // Predicated region
            $region113: #{tpu_custom_call.1} parent=100 // pred_check
              _
            $region114: #{tpu_custom_call.1} parent=100 // pred_check_branch
              %487 = sbr.rel target = $region116
            $region115: #{tpu_custom_call.1} parent=100 // pred_region
              _
            $region116: #{tpu_custom_call.1} parent=100 // pred_fallthru
              _
          $region101: #{tpu_custom_call.1} parent=96 // pred_fallthru
            _
          %488 = vnop
        $region97: #{tpu_custom_call.1} parent=19 // pred_fallthru
          _
        // Predicated region
        $region117: #{tpu_custom_call.1} parent=19 // pred_check
          %p489 = pneg %p231
        $region118: #{tpu_custom_call.1} parent=19 // pred_check_branch
          %491 = sbr.rel (%p489) target = $region120
        $region119: #{tpu_custom_call.1} parent=19 // pred_region
          %s492 = sand.u32 %s221, 1
          %s493 = sand.u32 %s221, 1
          %s494 = smul.addr %s493, 48
          %s495 = scalar_lea.vmem [#allocation7], %s494
          %s496 = sadd.s32 %s24, %s26
          %s497 = smul.u32 2, %s496
          %s498 = smul.addr %s25, 12
          %s499 = sadd.s32 %s497, %s498
          %s500 = smul.addr %s499, 8
          %s501 = scalar_lea.vmem %s6, %s500
          // Predicated region
          $region121: #{tpu_custom_call.1} parent=119 // pred_check
            _
          $region122: #{tpu_custom_call.1} parent=119 // pred_check_branch
            %503 = sbr.rel (0) target = $region124
          $region123: #{tpu_custom_call.1} parent=119 // pred_region
            // Predicated region
            $region125: #{tpu_custom_call.1} parent=123 // pred_check
              _
            $region126: #{tpu_custom_call.1} parent=123 // pred_check_branch
              %505 = sbr.rel (0) target = $region128
            $region127: #{tpu_custom_call.1} parent=123 // pred_region
              loop: start=0, step=1, limit=1
              $region129: #{tpu_custom_call.1} parent=127 // loop_pre_header
                _
              $region130: #{tpu_custom_call.1} parent=127 // loop_header
                %s507 = sphi 0, %s511
                %p508 = scmp.ge.s32.totalorder %s507, 1
                %s512 = sphi %s501, %s501
                %s513 = sphi %s495, %s495
              $region131: #{tpu_custom_call.1} parent=127 // loop_header_branch
                %510 = sbr.rel (%p508) target = $region135
              $region132: #{tpu_custom_call.1} parent=127 // loop_body
                %v514 = vld [vmem:[%s512] sm:$0xff]
                %515 = vst [vmem:[%s513] sm:$0xff] %v514
                %v516 = vld [vmem:[%s512 + $0x8] sm:$0xff]
                %517 = vst [vmem:[%s513 + $0x8] sm:$0xff] %v516
                %v518 = vld [vmem:[%s512 + $0x20] sm:$0xff]
                %519 = vst [vmem:[%s513 + $0x10] sm:$0xff] %v518
                %v520 = vld [vmem:[%s512 + $0x28] sm:$0xff]
                %521 = vst [vmem:[%s513 + $0x18] sm:$0xff] %v520
                %v522 = vld [vmem:[%s512 + $0x40] sm:$0xff]
                %523 = vst [vmem:[%s513 + $0x20] sm:$0xff] %v522
                %v524 = vld [vmem:[%s512 + $0x48] sm:$0xff]
                %525 = vst [vmem:[%s513 + $0x28] sm:$0xff] %v524
              $region133: #{tpu_custom_call.1} parent=127 // loop_footer
                %s511 = sadd.s32 1, %s507
              $region134: #{tpu_custom_call.1} parent=127 // loop_footer_branch
                %506 = sbr.rel target = $region130
              $region135: #{tpu_custom_call.1} parent=127 // loop_exit
                _
            $region128: #{tpu_custom_call.1} parent=123 // pred_fallthru
              _
            // Predicated region
            $region136: #{tpu_custom_call.1} parent=123 // pred_check
              _
            $region137: #{tpu_custom_call.1} parent=123 // pred_check_branch
              %527 = sbr.rel target = $region139
            $region138: #{tpu_custom_call.1} parent=123 // pred_region
              _
            $region139: #{tpu_custom_call.1} parent=123 // pred_fallthru
              _
          $region124: #{tpu_custom_call.1} parent=119 // pred_fallthru
            _
          %528 = vnop
        $region120: #{tpu_custom_call.1} parent=19 // pred_fallthru
          _
        // Predicated region
        $region140: #{tpu_custom_call.1} parent=19 // pred_check
          %p529 = pneg %p261
        $region141: #{tpu_custom_call.1} parent=19 // pred_check_branch
          %531 = sbr.rel (%p529) target = $region143
        $region142: #{tpu_custom_call.1} parent=19 // pred_region
          %s532 = sand.u32 %s251, 1
          %s533 = sand.u32 %s251, 1
          %s534 = smul.addr %s533, 48
          %s535 = scalar_lea.vmem [#allocation8], %s534
          %s536 = sadd.s32 %s24, %s26
          %s537 = smul.u32 2, %s536
          %s538 = smul.addr %s25, 12
          %s539 = sadd.s32 %s537, %s538
          %s540 = smul.addr %s539, 8
          %s541 = scalar_lea.vmem %s7, %s540
          // Predicated region
          $region144: #{tpu_custom_call.1} parent=142 // pred_check
            _
          $region145: #{tpu_custom_call.1} parent=142 // pred_check_branch
            %543 = sbr.rel (0) target = $region147
          $region146: #{tpu_custom_call.1} parent=142 // pred_region
            // Predicated region
            $region148: #{tpu_custom_call.1} parent=146 // pred_check
              _
            $region149: #{tpu_custom_call.1} parent=146 // pred_check_branch
              %545 = sbr.rel (0) target = $region151
            $region150: #{tpu_custom_call.1} parent=146 // pred_region
              loop: start=0, step=1, limit=1
              $region152: #{tpu_custom_call.1} parent=150 // loop_pre_header
                _
              $region153: #{tpu_custom_call.1} parent=150 // loop_header
                %s547 = sphi 0, %s551
                %p548 = scmp.ge.s32.totalorder %s547, 1
                %s552 = sphi %s541, %s541
                %s553 = sphi %s535, %s535
              $region154: #{tpu_custom_call.1} parent=150 // loop_header_branch
                %550 = sbr.rel (%p548) target = $region158
              $region155: #{tpu_custom_call.1} parent=150 // loop_body
                %v554 = vld [vmem:[%s552] sm:$0xff]
                %555 = vst [vmem:[%s553] sm:$0xff] %v554
                %v556 = vld [vmem:[%s552 + $0x8] sm:$0xff]
                %557 = vst [vmem:[%s553 + $0x8] sm:$0xff] %v556
                %v558 = vld [vmem:[%s552 + $0x20] sm:$0xff]
                %559 = vst [vmem:[%s553 + $0x10] sm:$0xff] %v558
                %v560 = vld [vmem:[%s552 + $0x28] sm:$0xff]
                %561 = vst [vmem:[%s553 + $0x18] sm:$0xff] %v560
                %v562 = vld [vmem:[%s552 + $0x40] sm:$0xff]
                %563 = vst [vmem:[%s553 + $0x20] sm:$0xff] %v562
                %v564 = vld [vmem:[%s552 + $0x48] sm:$0xff]
                %565 = vst [vmem:[%s553 + $0x28] sm:$0xff] %v564
              $region156: #{tpu_custom_call.1} parent=150 // loop_footer
                %s551 = sadd.s32 1, %s547
              $region157: #{tpu_custom_call.1} parent=150 // loop_footer_branch
                %546 = sbr.rel target = $region153
              $region158: #{tpu_custom_call.1} parent=150 // loop_exit
                _
            $region151: #{tpu_custom_call.1} parent=146 // pred_fallthru
              _
            // Predicated region
            $region159: #{tpu_custom_call.1} parent=146 // pred_check
              _
            $region160: #{tpu_custom_call.1} parent=146 // pred_check_branch
              %567 = sbr.rel target = $region162
            $region161: #{tpu_custom_call.1} parent=146 // pred_region
              _
            $region162: #{tpu_custom_call.1} parent=146 // pred_fallthru
              _
          $region147: #{tpu_custom_call.1} parent=142 // pred_fallthru
            _
          %568 = vnop
        $region143: #{tpu_custom_call.1} parent=19 // pred_fallthru
          _
      $region20: #{tpu_custom_call.1} parent=5 // pred_fallthru
        _
      %p569 = scmp.le.s32.totalorder 1, %s17
      %p570 = scmp.lt.s32.totalorder %s17, 5
      %p571 = pnand %p569, %p570
      %p572 = pneg %p571
      // Predicated region
      $region163: #{tpu_custom_call.1} parent=5 // pred_check
        _
      $region164: #{tpu_custom_call.1} parent=5 // pred_check_branch
        %574 = sbr.rel (%p571) target = $region166
      $region165: #{tpu_custom_call.1} parent=5 // pred_region
        %s575 = ssub.s32 %s17, 1
        %s576 = sand.u32 %s104, 1
        %s577 = sand.u32 %s104, 1
        %s578 = smul.addr %s577, 48
        %s579 = scalar_lea.vmem [#allocation3], %s578
        // Predicated region
        $region167: #{tpu_custom_call.1} parent=165 // pred_check
          %p580 = pneg %p117
        $region168: #{tpu_custom_call.1} parent=165 // pred_check_branch
          %582 = sbr.rel (%p580) target = $region170
        $region169: #{tpu_custom_call.1} parent=165 // pred_region
          _
        $region170: #{tpu_custom_call.1} parent=165 // pred_fallthru
          _
        %s583 = sand.u32 %s134, 1
        %s584 = sand.u32 %s134, 1
        %s585 = smul.addr %s584, 48
        %s586 = scalar_lea.vmem [#allocation4], %s585
        // Predicated region
        $region171: #{tpu_custom_call.1} parent=165 // pred_check
          %p587 = pneg %p147
        $region172: #{tpu_custom_call.1} parent=165 // pred_check_branch
          %589 = sbr.rel (%p587) target = $region174
        $region173: #{tpu_custom_call.1} parent=165 // pred_region
          _
        $region174: #{tpu_custom_call.1} parent=165 // pred_fallthru
          _
        %s590 = sand.u32 %s164, 1
        %s591 = sand.u32 %s164, 1
        %s592 = smul.addr %s591, 48
        %s593 = scalar_lea.vmem [#allocation5], %s592
        // Predicated region
        $region175: #{tpu_custom_call.1} parent=165 // pred_check
          %p594 = pneg %p177
        $region176: #{tpu_custom_call.1} parent=165 // pred_check_branch
          %596 = sbr.rel (%p594) target = $region178
        $region177: #{tpu_custom_call.1} parent=165 // pred_region
          _
        $region178: #{tpu_custom_call.1} parent=165 // pred_fallthru
          _
        %s597 = sand.u32 %s194, 1
        %s598 = sand.u32 %s194, 1
        %s599 = smul.addr %s598, 48
        %s600 = scalar_lea.vmem [#allocation6], %s599
        // Predicated region
        $region179: #{tpu_custom_call.1} parent=165 // pred_check
          %p601 = pneg %p207
        $region180: #{tpu_custom_call.1} parent=165 // pred_check_branch
          %603 = sbr.rel (%p601) target = $region182
        $region181: #{tpu_custom_call.1} parent=165 // pred_region
          _
        $region182: #{tpu_custom_call.1} parent=165 // pred_fallthru
          _
        %s604 = sand.u32 %s224, 1
        %s605 = sand.u32 %s224, 1
        %s606 = smul.addr %s605, 48
        %s607 = scalar_lea.vmem [#allocation7], %s606
        // Predicated region
        $region183: #{tpu_custom_call.1} parent=165 // pred_check
          %p608 = pneg %p237
        $region184: #{tpu_custom_call.1} parent=165 // pred_check_branch
          %610 = sbr.rel (%p608) target = $region186
        $region185: #{tpu_custom_call.1} parent=165 // pred_region
          _
        $region186: #{tpu_custom_call.1} parent=165 // pred_fallthru
          _
        %s611 = sand.u32 %s254, 1
        %s612 = sand.u32 %s254, 1
        %s613 = smul.addr %s612, 48
        %s614 = scalar_lea.vmem [#allocation8], %s613
        // Predicated region
        $region187: #{tpu_custom_call.1} parent=165 // pred_check
          %p615 = pneg %p267
        $region188: #{tpu_custom_call.1} parent=165 // pred_check_branch
          %617 = sbr.rel (%p615) target = $region190
        $region189: #{tpu_custom_call.1} parent=165 // pred_region
          _
        $region190: #{tpu_custom_call.1} parent=165 // pred_fallthru
          _
        %p618 = pneg %p57
        %p619 = pneg %p54
        %s620 = sadd.s32 %s27, %s29
        %s621 = smul.u32 2, %s620
        %p622 = scmp.lt.s32.totalorder %s28, 1
        %s623 = scalar_select %p622, %s28, 1
        %p624 = scmp.lt.s32.totalorder %s621, 3
        %s625 = scalar_select %p624, %s621, 3
        %s626 = smul.addr %s623, 4
        %s627 = sadd.s32 %s625, %s626
        %s628 = scalar_lea.vmem %s1, %s627
        %p629 = pneg %p87
        %p630 = pneg %p84
        %s631 = sand.u32 %s104, 1
        %s632 = sand.u32 %s104, 1
        %s633 = smul.addr %s632, 48
        %s634 = scalar_lea.vmem [#allocation3], %s633
        %p635 = pneg %p117
        %p636 = pneg %p114
        %s637 = sand.u32 %s134, 1
        %s638 = sand.u32 %s134, 1
        %s639 = smul.addr %s638, 48
        %s640 = scalar_lea.vmem [#allocation4], %s639
        %p641 = pneg %p147
        %p642 = pneg %p144
        %s643 = sand.u32 %s164, 1
        %s644 = sand.u32 %s164, 1
        %s645 = smul.addr %s644, 48
        %s646 = scalar_lea.vmem [#allocation5], %s645
        %p647 = pneg %p177
        %p648 = pneg %p174
        %s649 = sand.u32 %s194, 1
        %s650 = sand.u32 %s194, 1
        %s651 = smul.addr %s650, 48
        %s652 = scalar_lea.vmem [#allocation6], %s651
        %p653 = pneg %p207
        %p654 = pneg %p204
        %s655 = sand.u32 %s224, 1
        %s656 = sand.u32 %s224, 1
        %s657 = smul.addr %s656, 48
        %s658 = scalar_lea.vmem [#allocation7], %s657
        %p659 = pneg %p237
        %p660 = pneg %p234
        %s661 = sand.u32 %s254, 1
        %s662 = sand.u32 %s254, 1
        %s663 = smul.addr %s662, 48
        %s664 = scalar_lea.vmem [#allocation8], %s663
        %p665 = pneg %p267
        %p666 = pneg %p264
        %p667 = pneg %p293
        %p668 = pneg %p290
        %s669 = sand.u32 %s280, 1
        %s670 = scalar_lea.sflag [#allocation10], %s669
        %s671 = sand.u32 %s280, 1
        %s672 = smul.addr %s671, 16
        %s673 = scalar_lea.vmem [#allocation9], %s672
        %s674 = sadd.s32 %s27, %s29
        %s675 = smul.u32 2, %s674
        %p676 = scmp.lt.s32.totalorder %s28, 1
        %s677 = scalar_select %p676, %s28, 1
        %p678 = scmp.lt.s32.totalorder %s675, 3
        %s679 = scalar_select %p678, %s675, 3
        %s680 = smul.addr %s677, 4
        %s681 = sadd.s32 %s679, %s680
        %s682 = scalar_lea.vmem %s1, %s681
        %s683 = sadd.s32 %s27, %s29
        %s684 = smul.u32 2, %s683
        %s685 = sadd.s32 %s27, %s29
        %s686 = smul.u32 2, %s685
        %s687 = sadd.s32 %s27, %s29
        %s688 = smul.u32 2, %s687
        %s689 = sadd.s32 %s27, %s29
        %s690 = smul.u32 2, %s689
        %s691 = sadd.s32 %s27, %s29
        %s692 = smul.u32 2, %s691
        %s693 = sadd.s32 %s27, %s29
        %s694 = smul.u32 2, %s693
        %s695 = sadd.s32 %s27, %s29
        %s696 = smul.u32 2, %s695
        %p697 = scmp.eq.s32.totalorder %s28, 0
        %p698 = scmp.eq.s32.totalorder %s29, 0
        %p699 = pnand %p697, %p698
        %p700 = pneg %p699
        %p701 = scmp.eq.s32.totalorder %s28, 1
        %p702 = pnand %p701, %p698
        %p703 = pneg %p702
        // Predicated region
        $region191: #{tpu_custom_call.1} parent=165 // pred_check
          _
        $region192: #{tpu_custom_call.1} parent=165 // pred_check_branch
          %705 = sbr.rel (%p699) target = $region194
        $region193: #{tpu_custom_call.1} parent=165 // pred_region
          %706 = vst [vmem:[#allocation2] sm:$0xff] 0.0
          %707 = vst [vmem:[#allocation2 + $0x8] sm:$0xff] 0.0
        $region194: #{tpu_custom_call.1} parent=165 // pred_fallthru
          _
        %v708 = vld [vmem:[%s682] sm:$0x3]
        %v709 = vlaneseq
        %v710 = vshrl.u32 %v709, 7
        %v711 = vadd.s32 %v710, 8
        %v712 = vadd.s32 %v710, 16
        %v713 = vlaneseq
        %v714 = vshrl.u32 %v713, 7
        %v715 = vsub.s32 0, %v714
        %v716 = vrot.slane %v708, %v715
        %v717 = vlaneseq
        %v718 = vshrl.u32 %v717, 7
        %v719 = vsub.s32 1, %v718
        %v720 = vrot.slane %v708, %v719
        %vm721 = vcmp.eq.s32.totalorder %v710, %v716
        %vm722 = vcmp.eq.s32.totalorder %v710, %v720
        %vm723 = vcmp.eq.s32.totalorder %v711, %v716
        %vm724 = vcmp.eq.s32.totalorder %v711, %v720
        %vm725 = vcmp.eq.s32.totalorder %v712, %v716
        %vm726 = vcmp.eq.s32.totalorder %v712, %v720
        %v727 = vsel %vm721, 1, 0
        %v728 = vsel %vm722, 1, 0
        %v729 = vsel %vm723, 1, 0
        %v730 = vsel %vm724, 1, 0
        %v731 = vsel %vm725, 1, 0
        %v732 = vsel %vm726, 1, 0
        %v733 = vcvt.s32.f32 %v727
        %v734 = vcvt.s32.f32 %v728
        %v735 = vcvt.s32.f32 %v729
        %v736 = vcvt.s32.f32 %v730
        %v737 = vcvt.s32.f32 %v731
        %v738 = vcvt.s32.f32 %v732
        %v739 = vld [vmem:[%s0] sm:$0xff]
        %v740 = vld [vmem:[%s0 + $0x8] sm:$0xff]
        %v741 = vld [vmem:[%s0 + $0x10] sm:$0x1f]
        %743 = vset.pattern.permute.xlu0 0
        %744 = vperm.xlu0 %743, %v739
        %v745 = vpop.permute.xlu0 %744
        %748 = vset.pattern.permute.xlu0 0
        %749 = vperm.xlu0 %748, %v740
        %v750 = vpop.permute.xlu0 %749
        %753 = vset.pattern.permute.xlu0 0
        %754 = vperm.xlu0 %753, %v741
        %v755 = vpop.permute.xlu0 %754
        %v757 = vmul.f32 %v733, %v745
        %v758 = vmul.f32 %v734, %v745
        %v759 = vmul.f32 %v735, %v750
        %v760 = vmul.f32 %v736, %v750
        %v761 = vmul.f32 %v737, %v755
        %v762 = vmul.f32 %v738, %v755
        %v763 = vadd.f32 %v757, %v759
        %vm764 = vcmask 1044480
        %v765 = vsel %vm764, %v761, 0.0
        %v766 = vadd.f32 %v763, %v765
        %v767 = vrot.slane %v766, 4
        %v768 = vadd.f32 %v766, %v767
        %v769 = vrot.slane %v768, 2
        %v770 = vadd.f32 %v768, %v769
        %v771 = vrot.slane %v770, 1
        %v772 = vadd.f32 %v770, %v771
        %v773 = vadd.f32 %v758, %v760
        %v774 = vsel %vm764, %v762, 0.0
        %v775 = vadd.f32 %v773, %v774
        %v776 = vrot.slane %v775, 4
        %v777 = vadd.f32 %v775, %v776
        %v778 = vrot.slane %v777, 2
        %v779 = vadd.f32 %v777, %v778
        %v780 = vrot.slane %v779, 1
        %v781 = vadd.f32 %v779, %v780
        %v782 = vld [vmem:[%s579] sm:$0xff]
        %v783 = vld [vmem:[%s579 + $0x8] sm:$0xff]
        %v784 = vld [vmem:[%s579 + $0x10] sm:$0xff]
        %v785 = vld [vmem:[%s579 + $0x18] sm:$0xff]
        %v786 = vld [vmem:[%s579 + $0x20] sm:$0x1f]
        %v787 = vld [vmem:[%s579 + $0x28] sm:$0x1f]
        %v788 = vsel %vm764, %v786, -inf
        %v789 = vmax.f32 %v782, %v788
        %v790 = vmax.f32 %v789, %v784
        %v791 = vrot.slane %v790, 4
        %v792 = vmax.f32 %v790, %v791
        %v793 = vrot.slane %v792, 2
        %v794 = vmax.f32 %v792, %v793
        %v795 = vrot.slane %v794, 1
        %v796 = vmax.f32 %v794, %v795
        %v797 = vsel %vm764, %v787, -inf
        %v798 = vmax.f32 %v783, %v797
        %v799 = vmax.f32 %v798, %v785
        %v800 = vrot.slane %v799, 4
        %v801 = vmax.f32 %v799, %v800
        %v802 = vrot.slane %v801, 2
        %v803 = vmax.f32 %v801, %v802
        %v804 = vrot.slane %v803, 1
        %v805 = vmax.f32 %v803, %v804
        %v806 = vsub.f32 %v782, %v796
        %v807 = vsub.f32 %v783, %v805
        %v808 = vsub.f32 %v784, %v796
        %v809 = vsub.f32 %v785, %v805
        %v810 = vsub.f32 %v786, %v796
        %v811 = vsub.f32 %v787, %v805
        %v812 = vmul.f32 %v806, 1.442695
        %v813 = vpow.pop %v812
        %v814 = vmul.f32 %v807, 1.442695
        %v815 = vpow.pop %v814
        %v816 = vmul.f32 %v808, 1.442695
        %v817 = vpow.pop %v816
        %v818 = vmul.f32 %v809, 1.442695
        %v819 = vpow.pop %v818
        %v820 = vmul.f32 %v810, 1.442695
        %v821 = vpow.pop %v820
        %v822 = vmul.f32 %v811, 1.442695
        %v823 = vpow.pop %v822
        %v824 = vadd.f32 %v813, %v817
        %v825 = vsel %vm764, %v821, 0.0
        %v826 = vadd.f32 %v824, %v825
        %v827 = vrot.slane %v826, 4
        %v828 = vadd.f32 %v826, %v827
        %v829 = vrot.slane %v828, 2
        %v830 = vadd.f32 %v828, %v829
        %v831 = vrot.slane %v830, 1
        %v832 = vadd.f32 %v830, %v831
        %v833 = vadd.f32 %v815, %v819
        %v834 = vsel %vm764, %v823, 0.0
        %v835 = vadd.f32 %v833, %v834
        %v836 = vrot.slane %v835, 4
        %v837 = vadd.f32 %v835, %v836
        %v838 = vrot.slane %v837, 2
        %v839 = vadd.f32 %v837, %v838
        %v840 = vrot.slane %v839, 1
        %v841 = vadd.f32 %v839, %v840
        %v842 = vlog2.pop %v832
        %v843 = vmul.f32 %v842, 0.6931472
        %v844 = vlog2.pop %v841
        %v845 = vmul.f32 %v844, 0.6931472
        %v846 = vadd.f32 %v796, %v843
        %v847 = vadd.f32 %v805, %v845
        %v848 = vmul.f32 %v733, %v782
        %v849 = vmul.f32 %v734, %v783
        %v850 = vmul.f32 %v735, %v784
        %v851 = vmul.f32 %v736, %v785
        %v852 = vmul.f32 %v737, %v786
        %v853 = vmul.f32 %v738, %v787
        %v854 = vadd.f32 %v848, %v850
        %v855 = vsel %vm764, %v852, 0.0
        %v856 = vadd.f32 %v854, %v855
        %v857 = vrot.slane %v856, 4
        %v858 = vadd.f32 %v856, %v857
        %v859 = vrot.slane %v858, 2
        %v860 = vadd.f32 %v858, %v859
        %v861 = vrot.slane %v860, 1
        %v862 = vadd.f32 %v860, %v861
        %v863 = vadd.f32 %v849, %v851
        %v864 = vsel %vm764, %v853, 0.0
        %v865 = vadd.f32 %v863, %v864
        %v866 = vrot.slane %v865, 4
        %v867 = vadd.f32 %v865, %v866
        %v868 = vrot.slane %v867, 2
        %v869 = vadd.f32 %v867, %v868
        %v870 = vrot.slane %v869, 1
        %v871 = vadd.f32 %v869, %v870
        %v872 = vld [vmem:[#allocation2] ss:$8 sm:$0x3]
        %v873 = vsub.f32 %v846, %v862
        %v874 = vsub.f32 %v847, %v871
        %v875 = vmul.f32 %v772, %v873
        %v876 = vmul.f32 %v781, %v874
        %v879 = vcombine.low %v875, %v876
        %v881 = vunpack.c.l.s4 1966171168
        %v882 = vunpack.c.0.s8 %v881
        %v883 = vlaneseq
        %v884 = vshrl.u32 %v883, 7
        %v885 = vsub.s32 %v882, %v884
        %v886 = vrot.slane %v879, %v885
        %v888 = vunpack.c.l.s4 1966171168
        %v889 = vunpack.c.0.s8 %v888
        %v890 = vlaneseq
        %v891 = vshrl.u32 %v890, 7
        %v892 = vsub.s32 %v889, %v891
        %v893 = vrot.slane %v886, %v892
        %v895 = vadd.f32 %v872, %v893
        %v896 = vlaneseq
        %vm897 = vcmp.ge.s32.totalorder %v896, 0
        %vm898 = vcmp.lt.s32.totalorder %v896, 256
        %vm899 = vmand %vm897, %vm898
        %900 = vst.msk [vmem:[#allocation2] ss:$8 sm:$0x3] %vm899, %v895
        %901 = vst.msk [vmem:[#allocation2] ss:$8 sm:$0x0] %vm899, %v895
        %v902 = vld [vmem:[%s586] sm:$0xff]
        %v903 = vld [vmem:[%s586 + $0x8] sm:$0xff]
        %v904 = vld [vmem:[%s586 + $0x10] sm:$0xff]
        %v905 = vld [vmem:[%s586 + $0x18] sm:$0xff]
        %v906 = vld [vmem:[%s586 + $0x20] sm:$0x1f]
        %v907 = vld [vmem:[%s586 + $0x28] sm:$0x1f]
        %v908 = vsel %vm764, %v906, -inf
        %v909 = vmax.f32 %v902, %v908
        %v910 = vmax.f32 %v909, %v904
        %v911 = vrot.slane %v910, 4
        %v912 = vmax.f32 %v910, %v911
        %v913 = vrot.slane %v912, 2
        %v914 = vmax.f32 %v912, %v913
        %v915 = vrot.slane %v914, 1
        %v916 = vmax.f32 %v914, %v915
        %v917 = vsel %vm764, %v907, -inf
        %v918 = vmax.f32 %v903, %v917
        %v919 = vmax.f32 %v918, %v905
        %v920 = vrot.slane %v919, 4
        %v921 = vmax.f32 %v919, %v920
        %v922 = vrot.slane %v921, 2
        %v923 = vmax.f32 %v921, %v922
        %v924 = vrot.slane %v923, 1
        %v925 = vmax.f32 %v923, %v924
        %v926 = vsub.f32 %v902, %v916
        %v927 = vsub.f32 %v903, %v925
        %v928 = vsub.f32 %v904, %v916
        %v929 = vsub.f32 %v905, %v925
        %v930 = vsub.f32 %v906, %v916
        %v931 = vsub.f32 %v907, %v925
        %v932 = vmul.f32 %v926, 1.442695
        %v933 = vpow.pop %v932
        %v934 = vmul.f32 %v927, 1.442695
        %v935 = vpow.pop %v934
        %v936 = vmul.f32 %v928, 1.442695
        %v937 = vpow.pop %v936
        %v938 = vmul.f32 %v929, 1.442695
        %v939 = vpow.pop %v938
        %v940 = vmul.f32 %v930, 1.442695
        %v941 = vpow.pop %v940
        %v942 = vmul.f32 %v931, 1.442695
        %v943 = vpow.pop %v942
        %v944 = vadd.f32 %v933, %v937
        %v945 = vsel %vm764, %v941, 0.0
        %v946 = vadd.f32 %v944, %v945
        %v947 = vrot.slane %v946, 4
        %v948 = vadd.f32 %v946, %v947
        %v949 = vrot.slane %v948, 2
        %v950 = vadd.f32 %v948, %v949
        %v951 = vrot.slane %v950, 1
        %v952 = vadd.f32 %v950, %v951
        %v953 = vadd.f32 %v935, %v939
        %v954 = vsel %vm764, %v943, 0.0
        %v955 = vadd.f32 %v953, %v954
        %v956 = vrot.slane %v955, 4
        %v957 = vadd.f32 %v955, %v956
        %v958 = vrot.slane %v957, 2
        %v959 = vadd.f32 %v957, %v958
        %v960 = vrot.slane %v959, 1
        %v961 = vadd.f32 %v959, %v960
        %v962 = vlog2.pop %v952
        %v963 = vmul.f32 %v962, 0.6931472
        %v964 = vlog2.pop %v961
        %v965 = vmul.f32 %v964, 0.6931472
        %v966 = vadd.f32 %v916, %v963
        %v967 = vadd.f32 %v925, %v965
        %v968 = vmul.f32 %v733, %v902
        %v969 = vmul.f32 %v734, %v903
        %v970 = vmul.f32 %v735, %v904
        %v971 = vmul.f32 %v736, %v905
        %v972 = vmul.f32 %v737, %v906
        %v973 = vmul.f32 %v738, %v907
        %v974 = vadd.f32 %v968, %v970
        %v975 = vsel %vm764, %v972, 0.0
        %v976 = vadd.f32 %v974, %v975
        %v977 = vrot.slane %v976, 4
        %v978 = vadd.f32 %v976, %v977
        %v979 = vrot.slane %v978, 2
        %v980 = vadd.f32 %v978, %v979
        %v981 = vrot.slane %v980, 1
        %v982 = vadd.f32 %v980, %v981
        %v983 = vadd.f32 %v969, %v971
        %v984 = vsel %vm764, %v973, 0.0
        %v985 = vadd.f32 %v983, %v984
        %v986 = vrot.slane %v985, 4
        %v987 = vadd.f32 %v985, %v986
        %v988 = vrot.slane %v987, 2
        %v989 = vadd.f32 %v987, %v988
        %v990 = vrot.slane %v989, 1
        %v991 = vadd.f32 %v989, %v990
        %s992 = scalar_lea.vmem [#allocation2], 1
        %v993 = vld [vmem:[%s992] ss:$8 sm:$0x3]
        %v994 = vsub.f32 %v966, %v982
        %v995 = vsub.f32 %v967, %v991
        %v996 = vmul.f32 %v772, %v994
        %v997 = vmul.f32 %v781, %v995
        %v1000 = vcombine.low %v996, %v997
        %v1002 = vunpack.c.l.s4 1966171168
        %v1003 = vunpack.c.0.s8 %v1002
        %v1004 = vlaneseq
        %v1005 = vshrl.u32 %v1004, 7
        %v1006 = vsub.s32 %v1003, %v1005
        %v1007 = vrot.slane %v1000, %v1006
        %v1009 = vunpack.c.l.s4 1966171168
        %v1010 = vunpack.c.0.s8 %v1009
        %v1011 = vlaneseq
        %v1012 = vshrl.u32 %v1011, 7
        %v1013 = vsub.s32 %v1010, %v1012
        %v1014 = vrot.slane %v1007, %v1013
        %v1016 = vadd.f32 %v993, %v1014
        %1017 = vst.msk [vmem:[%s992] ss:$8 sm:$0x3] %vm899, %v1016
        %1018 = vst.msk [vmem:[%s992] ss:$8 sm:$0x0] %vm899, %v1016
        %v1019 = vld [vmem:[%s593] sm:$0xff]
        %v1020 = vld [vmem:[%s593 + $0x8] sm:$0xff]
        %v1021 = vld [vmem:[%s593 + $0x10] sm:$0xff]
        %v1022 = vld [vmem:[%s593 + $0x18] sm:$0xff]
        %v1023 = vld [vmem:[%s593 + $0x20] sm:$0x1f]
        %v1024 = vld [vmem:[%s593 + $0x28] sm:$0x1f]
        %v1025 = vsel %vm764, %v1023, -inf
        %v1026 = vmax.f32 %v1019, %v1025
        %v1027 = vmax.f32 %v1026, %v1021
        %v1028 = vrot.slane %v1027, 4
        %v1029 = vmax.f32 %v1027, %v1028
        %v1030 = vrot.slane %v1029, 2
        %v1031 = vmax.f32 %v1029, %v1030
        %v1032 = vrot.slane %v1031, 1
        %v1033 = vmax.f32 %v1031, %v1032
        %v1034 = vsel %vm764, %v1024, -inf
        %v1035 = vmax.f32 %v1020, %v1034
        %v1036 = vmax.f32 %v1035, %v1022
        %v1037 = vrot.slane %v1036, 4
        %v1038 = vmax.f32 %v1036, %v1037
        %v1039 = vrot.slane %v1038, 2
        %v1040 = vmax.f32 %v1038, %v1039
        %v1041 = vrot.slane %v1040, 1
        %v1042 = vmax.f32 %v1040, %v1041
        %v1043 = vsub.f32 %v1019, %v1033
        %v1044 = vsub.f32 %v1020, %v1042
        %v1045 = vsub.f32 %v1021, %v1033
        %v1046 = vsub.f32 %v1022, %v1042
        %v1047 = vsub.f32 %v1023, %v1033
        %v1048 = vsub.f32 %v1024, %v1042
        %v1049 = vmul.f32 %v1043, 1.442695
        %v1050 = vpow.pop %v1049
        %v1051 = vmul.f32 %v1044, 1.442695
        %v1052 = vpow.pop %v1051
        %v1053 = vmul.f32 %v1045, 1.442695
        %v1054 = vpow.pop %v1053
        %v1055 = vmul.f32 %v1046, 1.442695
        %v1056 = vpow.pop %v1055
        %v1057 = vmul.f32 %v1047, 1.442695
        %v1058 = vpow.pop %v1057
        %v1059 = vmul.f32 %v1048, 1.442695
        %v1060 = vpow.pop %v1059
        %v1061 = vadd.f32 %v1050, %v1054
        %v1062 = vsel %vm764, %v1058, 0.0
        %v1063 = vadd.f32 %v1061, %v1062
        %v1064 = vrot.slane %v1063, 4
        %v1065 = vadd.f32 %v1063, %v1064
        %v1066 = vrot.slane %v1065, 2
        %v1067 = vadd.f32 %v1065, %v1066
        %v1068 = vrot.slane %v1067, 1
        %v1069 = vadd.f32 %v1067, %v1068
        %v1070 = vadd.f32 %v1052, %v1056
        %v1071 = vsel %vm764, %v1060, 0.0
        %v1072 = vadd.f32 %v1070, %v1071
        %v1073 = vrot.slane %v1072, 4
        %v1074 = vadd.f32 %v1072, %v1073
        %v1075 = vrot.slane %v1074, 2
        %v1076 = vadd.f32 %v1074, %v1075
        %v1077 = vrot.slane %v1076, 1
        %v1078 = vadd.f32 %v1076, %v1077
        %v1079 = vlog2.pop %v1069
        %v1080 = vmul.f32 %v1079, 0.6931472
        %v1081 = vlog2.pop %v1078
        %v1082 = vmul.f32 %v1081, 0.6931472
        %v1083 = vadd.f32 %v1033, %v1080
        %v1084 = vadd.f32 %v1042, %v1082
        %v1085 = vmul.f32 %v733, %v1019
        %v1086 = vmul.f32 %v734, %v1020
        %v1087 = vmul.f32 %v735, %v1021
        %v1088 = vmul.f32 %v736, %v1022
        %v1089 = vmul.f32 %v737, %v1023
        %v1090 = vmul.f32 %v738, %v1024
        %v1091 = vadd.f32 %v1085, %v1087
        %v1092 = vsel %vm764, %v1089, 0.0
        %v1093 = vadd.f32 %v1091, %v1092
        %v1094 = vrot.slane %v1093, 4
        %v1095 = vadd.f32 %v1093, %v1094
        %v1096 = vrot.slane %v1095, 2
        %v1097 = vadd.f32 %v1095, %v1096
        %v1098 = vrot.slane %v1097, 1
        %v1099 = vadd.f32 %v1097, %v1098
        %v1100 = vadd.f32 %v1086, %v1088
        %v1101 = vsel %vm764, %v1090, 0.0
        %v1102 = vadd.f32 %v1100, %v1101
        %v1103 = vrot.slane %v1102, 4
        %v1104 = vadd.f32 %v1102, %v1103
        %v1105 = vrot.slane %v1104, 2
        %v1106 = vadd.f32 %v1104, %v1105
        %v1107 = vrot.slane %v1106, 1
        %v1108 = vadd.f32 %v1106, %v1107
        %s1109 = scalar_lea.vmem [#allocation2], 2
        %v1110 = vld [vmem:[%s1109] ss:$8 sm:$0x3]
        %v1111 = vsub.f32 %v1083, %v1099
        %v1112 = vsub.f32 %v1084, %v1108
        %v1113 = vmul.f32 %v772, %v1111
        %v1114 = vmul.f32 %v781, %v1112
        %v1117 = vcombine.low %v1113, %v1114
        %v1119 = vunpack.c.l.s4 1966171168
        %v1120 = vunpack.c.0.s8 %v1119
        %v1121 = vlaneseq
        %v1122 = vshrl.u32 %v1121, 7
        %v1123 = vsub.s32 %v1120, %v1122
        %v1124 = vrot.slane %v1117, %v1123
        %v1126 = vunpack.c.l.s4 1966171168
        %v1127 = vunpack.c.0.s8 %v1126
        %v1128 = vlaneseq
        %v1129 = vshrl.u32 %v1128, 7
        %v1130 = vsub.s32 %v1127, %v1129
        %v1131 = vrot.slane %v1124, %v1130
        %v1133 = vadd.f32 %v1110, %v1131
        %1134 = vst.msk [vmem:[%s1109] ss:$8 sm:$0x3] %vm899, %v1133
        %1135 = vst.msk [vmem:[%s1109] ss:$8 sm:$0x0] %vm899, %v1133
        %v1136 = vld [vmem:[%s600] sm:$0xff]
        %v1137 = vld [vmem:[%s600 + $0x8] sm:$0xff]
        %v1138 = vld [vmem:[%s600 + $0x10] sm:$0xff]
        %v1139 = vld [vmem:[%s600 + $0x18] sm:$0xff]
        %v1140 = vld [vmem:[%s600 + $0x20] sm:$0x1f]
        %v1141 = vld [vmem:[%s600 + $0x28] sm:$0x1f]
        %v1142 = vsel %vm764, %v1140, -inf
        %v1143 = vmax.f32 %v1136, %v1142
        %v1144 = vmax.f32 %v1143, %v1138
        %v1145 = vrot.slane %v1144, 4
        %v1146 = vmax.f32 %v1144, %v1145
        %v1147 = vrot.slane %v1146, 2
        %v1148 = vmax.f32 %v1146, %v1147
        %v1149 = vrot.slane %v1148, 1
        %v1150 = vmax.f32 %v1148, %v1149
        %v1151 = vsel %vm764, %v1141, -inf
        %v1152 = vmax.f32 %v1137, %v1151
        %v1153 = vmax.f32 %v1152, %v1139
        %v1154 = vrot.slane %v1153, 4
        %v1155 = vmax.f32 %v1153, %v1154
        %v1156 = vrot.slane %v1155, 2
        %v1157 = vmax.f32 %v1155, %v1156
        %v1158 = vrot.slane %v1157, 1
        %v1159 = vmax.f32 %v1157, %v1158
        %v1160 = vsub.f32 %v1136, %v1150
        %v1161 = vsub.f32 %v1137, %v1159
        %v1162 = vsub.f32 %v1138, %v1150
        %v1163 = vsub.f32 %v1139, %v1159
        %v1164 = vsub.f32 %v1140, %v1150
        %v1165 = vsub.f32 %v1141, %v1159
        %v1166 = vmul.f32 %v1160, 1.442695
        %v1167 = vpow.pop %v1166
        %v1168 = vmul.f32 %v1161, 1.442695
        %v1169 = vpow.pop %v1168
        %v1170 = vmul.f32 %v1162, 1.442695
        %v1171 = vpow.pop %v1170
        %v1172 = vmul.f32 %v1163, 1.442695
        %v1173 = vpow.pop %v1172
        %v1174 = vmul.f32 %v1164, 1.442695
        %v1175 = vpow.pop %v1174
        %v1176 = vmul.f32 %v1165, 1.442695
        %v1177 = vpow.pop %v1176
        %v1178 = vadd.f32 %v1167, %v1171
        %v1179 = vsel %vm764, %v1175, 0.0
        %v1180 = vadd.f32 %v1178, %v1179
        %v1181 = vrot.slane %v1180, 4
        %v1182 = vadd.f32 %v1180, %v1181
        %v1183 = vrot.slane %v1182, 2
        %v1184 = vadd.f32 %v1182, %v1183
        %v1185 = vrot.slane %v1184, 1
        %v1186 = vadd.f32 %v1184, %v1185
        %v1187 = vadd.f32 %v1169, %v1173
        %v1188 = vsel %vm764, %v1177, 0.0
        %v1189 = vadd.f32 %v1187, %v1188
        %v1190 = vrot.slane %v1189, 4
        %v1191 = vadd.f32 %v1189, %v1190
        %v1192 = vrot.slane %v1191, 2
        %v1193 = vadd.f32 %v1191, %v1192
        %v1194 = vrot.slane %v1193, 1
        %v1195 = vadd.f32 %v1193, %v1194
        %v1196 = vlog2.pop %v1186
        %v1197 = vmul.f32 %v1196, 0.6931472
        %v1198 = vlog2.pop %v1195
        %v1199 = vmul.f32 %v1198, 0.6931472
        %v1200 = vadd.f32 %v1150, %v1197
        %v1201 = vadd.f32 %v1159, %v1199
        %v1202 = vmul.f32 %v733, %v1136
        %v1203 = vmul.f32 %v734, %v1137
        %v1204 = vmul.f32 %v735, %v1138
        %v1205 = vmul.f32 %v736, %v1139
        %v1206 = vmul.f32 %v737, %v1140
        %v1207 = vmul.f32 %v738, %v1141
        %v1208 = vadd.f32 %v1202, %v1204
        %v1209 = vsel %vm764, %v1206, 0.0
        %v1210 = vadd.f32 %v1208, %v1209
        %v1211 = vrot.slane %v1210, 4
        %v1212 = vadd.f32 %v1210, %v1211
        %v1213 = vrot.slane %v1212, 2
        %v1214 = vadd.f32 %v1212, %v1213
        %v1215 = vrot.slane %v1214, 1
        %v1216 = vadd.f32 %v1214, %v1215
        %v1217 = vadd.f32 %v1203, %v1205
        %v1218 = vsel %vm764, %v1207, 0.0
        %v1219 = vadd.f32 %v1217, %v1218
        %v1220 = vrot.slane %v1219, 4
        %v1221 = vadd.f32 %v1219, %v1220
        %v1222 = vrot.slane %v1221, 2
        %v1223 = vadd.f32 %v1221, %v1222
        %v1224 = vrot.slane %v1223, 1
        %v1225 = vadd.f32 %v1223, %v1224
        %s1226 = scalar_lea.vmem [#allocation2], 3
        %v1227 = vld [vmem:[%s1226] ss:$8 sm:$0x3]
        %v1228 = vsub.f32 %v1200, %v1216
        %v1229 = vsub.f32 %v1201, %v1225
        %v1230 = vmul.f32 %v772, %v1228
        %v1231 = vmul.f32 %v781, %v1229
        %v1234 = vcombine.low %v1230, %v1231
        %v1236 = vunpack.c.l.s4 1966171168
        %v1237 = vunpack.c.0.s8 %v1236
        %v1238 = vlaneseq
        %v1239 = vshrl.u32 %v1238, 7
        %v1240 = vsub.s32 %v1237, %v1239
        %v1241 = vrot.slane %v1234, %v1240
        %v1243 = vunpack.c.l.s4 1966171168
        %v1244 = vunpack.c.0.s8 %v1243
        %v1245 = vlaneseq
        %v1246 = vshrl.u32 %v1245, 7
        %v1247 = vsub.s32 %v1244, %v1246
        %v1248 = vrot.slane %v1241, %v1247
        %v1250 = vadd.f32 %v1227, %v1248
        %1251 = vst.msk [vmem:[%s1226] ss:$8 sm:$0x3] %vm899, %v1250
        %1252 = vst.msk [vmem:[%s1226] ss:$8 sm:$0x0] %vm899, %v1250
        %v1253 = vld [vmem:[%s607] sm:$0xff]
        %v1254 = vld [vmem:[%s607 + $0x8] sm:$0xff]
        %v1255 = vld [vmem:[%s607 + $0x10] sm:$0xff]
        %v1256 = vld [vmem:[%s607 + $0x18] sm:$0xff]
        %v1257 = vld [vmem:[%s607 + $0x20] sm:$0x1f]
        %v1258 = vld [vmem:[%s607 + $0x28] sm:$0x1f]
        %v1259 = vsel %vm764, %v1257, -inf
        %v1260 = vmax.f32 %v1253, %v1259
        %v1261 = vmax.f32 %v1260, %v1255
        %v1262 = vrot.slane %v1261, 4
        %v1263 = vmax.f32 %v1261, %v1262
        %v1264 = vrot.slane %v1263, 2
        %v1265 = vmax.f32 %v1263, %v1264
        %v1266 = vrot.slane %v1265, 1
        %v1267 = vmax.f32 %v1265, %v1266
        %v1268 = vsel %vm764, %v1258, -inf
        %v1269 = vmax.f32 %v1254, %v1268
        %v1270 = vmax.f32 %v1269, %v1256
        %v1271 = vrot.slane %v1270, 4
        %v1272 = vmax.f32 %v1270, %v1271
        %v1273 = vrot.slane %v1272, 2
        %v1274 = vmax.f32 %v1272, %v1273
        %v1275 = vrot.slane %v1274, 1
        %v1276 = vmax.f32 %v1274, %v1275
        %v1277 = vsub.f32 %v1253, %v1267
        %v1278 = vsub.f32 %v1254, %v1276
        %v1279 = vsub.f32 %v1255, %v1267
        %v1280 = vsub.f32 %v1256, %v1276
        %v1281 = vsub.f32 %v1257, %v1267
        %v1282 = vsub.f32 %v1258, %v1276
        %v1283 = vmul.f32 %v1277, 1.442695
        %v1284 = vpow.pop %v1283
        %v1285 = vmul.f32 %v1278, 1.442695
        %v1286 = vpow.pop %v1285
        %v1287 = vmul.f32 %v1279, 1.442695
        %v1288 = vpow.pop %v1287
        %v1289 = vmul.f32 %v1280, 1.442695
        %v1290 = vpow.pop %v1289
        %v1291 = vmul.f32 %v1281, 1.442695
        %v1292 = vpow.pop %v1291
        %v1293 = vmul.f32 %v1282, 1.442695
        %v1294 = vpow.pop %v1293
        %v1295 = vadd.f32 %v1284, %v1288
        %v1296 = vsel %vm764, %v1292, 0.0
        %v1297 = vadd.f32 %v1295, %v1296
        %v1298 = vrot.slane %v1297, 4
        %v1299 = vadd.f32 %v1297, %v1298
        %v1300 = vrot.slane %v1299, 2
        %v1301 = vadd.f32 %v1299, %v1300
        %v1302 = vrot.slane %v1301, 1
        %v1303 = vadd.f32 %v1301, %v1302
        %v1304 = vadd.f32 %v1286, %v1290
        %v1305 = vsel %vm764, %v1294, 0.0
        %v1306 = vadd.f32 %v1304, %v1305
        %v1307 = vrot.slane %v1306, 4
        %v1308 = vadd.f32 %v1306, %v1307
        %v1309 = vrot.slane %v1308, 2
        %v1310 = vadd.f32 %v1308, %v1309
        %v1311 = vrot.slane %v1310, 1
        %v1312 = vadd.f32 %v1310, %v1311
        %v1313 = vlog2.pop %v1303
        %v1314 = vmul.f32 %v1313, 0.6931472
        %v1315 = vlog2.pop %v1312
        %v1316 = vmul.f32 %v1315, 0.6931472
        %v1317 = vadd.f32 %v1267, %v1314
        %v1318 = vadd.f32 %v1276, %v1316
        %v1319 = vmul.f32 %v733, %v1253
        %v1320 = vmul.f32 %v734, %v1254
        %v1321 = vmul.f32 %v735, %v1255
        %v1322 = vmul.f32 %v736, %v1256
        %v1323 = vmul.f32 %v737, %v1257
        %v1324 = vmul.f32 %v738, %v1258
        %v1325 = vadd.f32 %v1319, %v1321
        %v1326 = vsel %vm764, %v1323, 0.0
        %v1327 = vadd.f32 %v1325, %v1326
        %v1328 = vrot.slane %v1327, 4
        %v1329 = vadd.f32 %v1327, %v1328
        %v1330 = vrot.slane %v1329, 2
        %v1331 = vadd.f32 %v1329, %v1330
        %v1332 = vrot.slane %v1331, 1
        %v1333 = vadd.f32 %v1331, %v1332
        %v1334 = vadd.f32 %v1320, %v1322
        %v1335 = vsel %vm764, %v1324, 0.0
        %v1336 = vadd.f32 %v1334, %v1335
        %v1337 = vrot.slane %v1336, 4
        %v1338 = vadd.f32 %v1336, %v1337
        %v1339 = vrot.slane %v1338, 2
        %v1340 = vadd.f32 %v1338, %v1339
        %v1341 = vrot.slane %v1340, 1
        %v1342 = vadd.f32 %v1340, %v1341
        %s1343 = scalar_lea.vmem [#allocation2], 4
        %v1344 = vld [vmem:[%s1343] ss:$8 sm:$0x3]
        %v1345 = vsub.f32 %v1317, %v1333
        %v1346 = vsub.f32 %v1318, %v1342
        %v1347 = vmul.f32 %v772, %v1345
        %v1348 = vmul.f32 %v781, %v1346
        %v1351 = vcombine.low %v1347, %v1348
        %v1353 = vunpack.c.l.s4 1966171168
        %v1354 = vunpack.c.0.s8 %v1353
        %v1355 = vlaneseq
        %v1356 = vshrl.u32 %v1355, 7
        %v1357 = vsub.s32 %v1354, %v1356
        %v1358 = vrot.slane %v1351, %v1357
        %v1360 = vunpack.c.l.s4 1966171168
        %v1361 = vunpack.c.0.s8 %v1360
        %v1362 = vlaneseq
        %v1363 = vshrl.u32 %v1362, 7
        %v1364 = vsub.s32 %v1361, %v1363
        %v1365 = vrot.slane %v1358, %v1364
        %v1367 = vadd.f32 %v1344, %v1365
        %1368 = vst.msk [vmem:[%s1343] ss:$8 sm:$0x3] %vm899, %v1367
        %1369 = vst.msk [vmem:[%s1343] ss:$8 sm:$0x0] %vm899, %v1367
        %v1370 = vld [vmem:[%s614] sm:$0xff]
        %v1371 = vld [vmem:[%s614 + $0x8] sm:$0xff]
        %v1372 = vld [vmem:[%s614 + $0x10] sm:$0xff]
        %v1373 = vld [vmem:[%s614 + $0x18] sm:$0xff]
        %v1374 = vld [vmem:[%s614 + $0x20] sm:$0x1f]
        %v1375 = vld [vmem:[%s614 + $0x28] sm:$0x1f]
        %v1376 = vsel %vm764, %v1374, -inf
        %v1377 = vmax.f32 %v1370, %v1376
        %v1378 = vmax.f32 %v1377, %v1372
        %v1379 = vrot.slane %v1378, 4
        %v1380 = vmax.f32 %v1378, %v1379
        %v1381 = vrot.slane %v1380, 2
        %v1382 = vmax.f32 %v1380, %v1381
        %v1383 = vrot.slane %v1382, 1
        %v1384 = vmax.f32 %v1382, %v1383
        %v1385 = vsel %vm764, %v1375, -inf
        %v1386 = vmax.f32 %v1371, %v1385
        %v1387 = vmax.f32 %v1386, %v1373
        %v1388 = vrot.slane %v1387, 4
        %v1389 = vmax.f32 %v1387, %v1388
        %v1390 = vrot.slane %v1389, 2
        %v1391 = vmax.f32 %v1389, %v1390
        %v1392 = vrot.slane %v1391, 1
        %v1393 = vmax.f32 %v1391, %v1392
        %v1394 = vsub.f32 %v1370, %v1384
        %v1395 = vsub.f32 %v1371, %v1393
        %v1396 = vsub.f32 %v1372, %v1384
        %v1397 = vsub.f32 %v1373, %v1393
        %v1398 = vsub.f32 %v1374, %v1384
        %v1399 = vsub.f32 %v1375, %v1393
        %v1400 = vmul.f32 %v1394, 1.442695
        %v1401 = vpow.pop %v1400
        %v1402 = vmul.f32 %v1395, 1.442695
        %v1403 = vpow.pop %v1402
        %v1404 = vmul.f32 %v1396, 1.442695
        %v1405 = vpow.pop %v1404
        %v1406 = vmul.f32 %v1397, 1.442695
        %v1407 = vpow.pop %v1406
        %v1408 = vmul.f32 %v1398, 1.442695
        %v1409 = vpow.pop %v1408
        %v1410 = vmul.f32 %v1399, 1.442695
        %v1411 = vpow.pop %v1410
        %v1412 = vadd.f32 %v1401, %v1405
        %v1413 = vsel %vm764, %v1409, 0.0
        %v1414 = vadd.f32 %v1412, %v1413
        %v1415 = vrot.slane %v1414, 4
        %v1416 = vadd.f32 %v1414, %v1415
        %v1417 = vrot.slane %v1416, 2
        %v1418 = vadd.f32 %v1416, %v1417
        %v1419 = vrot.slane %v1418, 1
        %v1420 = vadd.f32 %v1418, %v1419
        %v1421 = vadd.f32 %v1403, %v1407
        %v1422 = vsel %vm764, %v1411, 0.0
        %v1423 = vadd.f32 %v1421, %v1422
        %v1424 = vrot.slane %v1423, 4
        %v1425 = vadd.f32 %v1423, %v1424
        %v1426 = vrot.slane %v1425, 2
        %v1427 = vadd.f32 %v1425, %v1426
        %v1428 = vrot.slane %v1427, 1
        %v1429 = vadd.f32 %v1427, %v1428
        %v1430 = vlog2.pop %v1420
        %v1431 = vmul.f32 %v1430, 0.6931472
        %v1432 = vlog2.pop %v1429
        %v1433 = vmul.f32 %v1432, 0.6931472
        %v1434 = vadd.f32 %v1384, %v1431
        %v1435 = vadd.f32 %v1393, %v1433
        %v1436 = vmul.f32 %v733, %v1370
        %v1437 = vmul.f32 %v734, %v1371
        %v1438 = vmul.f32 %v735, %v1372
        %v1439 = vmul.f32 %v736, %v1373
        %v1440 = vmul.f32 %v737, %v1374
        %v1441 = vmul.f32 %v738, %v1375
        %v1442 = vadd.f32 %v1436, %v1438
        %v1443 = vsel %vm764, %v1440, 0.0
        %v1444 = vadd.f32 %v1442, %v1443
        %v1445 = vrot.slane %v1444, 4
        %v1446 = vadd.f32 %v1444, %v1445
        %v1447 = vrot.slane %v1446, 2
        %v1448 = vadd.f32 %v1446, %v1447
        %v1449 = vrot.slane %v1448, 1
        %v1450 = vadd.f32 %v1448, %v1449
        %v1451 = vadd.f32 %v1437, %v1439
        %v1452 = vsel %vm764, %v1441, 0.0
        %v1453 = vadd.f32 %v1451, %v1452
        %v1454 = vrot.slane %v1453, 4
        %v1455 = vadd.f32 %v1453, %v1454
        %v1456 = vrot.slane %v1455, 2
        %v1457 = vadd.f32 %v1455, %v1456
        %v1458 = vrot.slane %v1457, 1
        %v1459 = vadd.f32 %v1457, %v1458
        %s1460 = scalar_lea.vmem [#allocation2], 5
        %v1461 = vld [vmem:[%s1460] ss:$8 sm:$0x3]
        %v1462 = vsub.f32 %v1434, %v1450
        %v1463 = vsub.f32 %v1435, %v1459
        %v1464 = vmul.f32 %v772, %v1462
        %v1465 = vmul.f32 %v781, %v1463
        %v1468 = vcombine.low %v1464, %v1465
        %v1470 = vunpack.c.l.s4 1966171168
        %v1471 = vunpack.c.0.s8 %v1470
        %v1472 = vlaneseq
        %v1473 = vshrl.u32 %v1472, 7
        %v1474 = vsub.s32 %v1471, %v1473
        %v1475 = vrot.slane %v1468, %v1474
        %v1477 = vunpack.c.l.s4 1966171168
        %v1478 = vunpack.c.0.s8 %v1477
        %v1479 = vlaneseq
        %v1480 = vshrl.u32 %v1479, 7
        %v1481 = vsub.s32 %v1478, %v1480
        %v1482 = vrot.slane %v1475, %v1481
        %v1484 = vadd.f32 %v1461, %v1482
        %1485 = vst.msk [vmem:[%s1460] ss:$8 sm:$0x3] %vm899, %v1484
        %1486 = vst.msk [vmem:[%s1460] ss:$8 sm:$0x0] %vm899, %v1484
        %s1487 = scalar_lea.vmem [#allocation2], 6
        %v1488 = vld [vmem:[%s1487] ss:$8 sm:$0x3]
        %v1491 = vcombine.low %v772, %v781
        %v1493 = vunpack.c.l.s4 1966171168
        %v1494 = vunpack.c.0.s8 %v1493
        %v1495 = vlaneseq
        %v1496 = vshrl.u32 %v1495, 7
        %v1497 = vsub.s32 %v1494, %v1496
        %v1498 = vrot.slane %v1491, %v1497
        %v1500 = vunpack.c.l.s4 1966171168
        %v1501 = vunpack.c.0.s8 %v1500
        %v1502 = vlaneseq
        %v1503 = vshrl.u32 %v1502, 7
        %v1504 = vsub.s32 %v1501, %v1503
        %v1505 = vrot.slane %v1498, %v1504
        %v1507 = vadd.f32 %v1488, %v1505
        %1508 = vst.msk [vmem:[%s1487] ss:$8 sm:$0x3] %vm899, %v1507
        %1509 = vst.msk [vmem:[%s1487] ss:$8 sm:$0x0] %vm899, %v1507
        // Predicated region
        $region195: #{tpu_custom_call.1} parent=165 // pred_check
          _
        $region196: #{tpu_custom_call.1} parent=165 // pred_check_branch
          %1511 = sbr.rel (%p702) target = $region198
        $region197: #{tpu_custom_call.1} parent=165 // pred_region
          %v1512 = vld [vmem:[#allocation2] sm:$0xff]
          %v1513 = vld [vmem:[#allocation2 + $0x8] sm:$0xff]
          %1514 = vst [vmem:[%s673] sm:$0xff] %v1512
          %1515 = vst [vmem:[%s673 + $0x8] sm:$0xff] %v1513
        $region198: #{tpu_custom_call.1} parent=165 // pred_fallthru
          _
        %s1516 = sand.u32 %s280, 1
        %s1517 = scalar_lea.sflag [#allocation10], %s1516
        %s1518 = sand.u32 %s280, 1
        %s1519 = smul.addr %s1518, 16
        %s1520 = scalar_lea.vmem [#allocation9], %s1519
        // Predicated region
        $region199: #{tpu_custom_call.1} parent=165 // pred_check
          %p1521 = pneg %p290
        $region200: #{tpu_custom_call.1} parent=165 // pred_check_branch
          %1523 = sbr.rel (%p1521) target = $region202
        $region201: #{tpu_custom_call.1} parent=165 // pred_region
          %s1525 = ssub.s32 256, 256
          %1526 = vsyncadd %s1517, %s1525
          %s1527 = smul.addr %s27, 2
          %s1528 = smul.addr %s1527, 128
          %s1529 = scalar_lea.hbm %s8, %s1528
          %s1531 = sshll.u32 %s1520, 4
          %s1532 = int_to_ptr.vmem [resolvable:$true] %s1531
          %1534 = dma.vmem_to_hbm [thread:$0]  %s1532, 256, %s1529, %s1517
        $region202: #{tpu_custom_call.1} parent=165 // pred_fallthru
          _
      $region166: #{tpu_custom_call.1} parent=5 // pred_fallthru
        _
      %p1535 = scmp.le.s32.totalorder 2, %s17
      // Predicated region
      $region203: #{tpu_custom_call.1} parent=5 // pred_check
        %p1536 = pneg %p1535
      $region204: #{tpu_custom_call.1} parent=5 // pred_check_branch
        %1538 = sbr.rel (%p1536) target = $region206
      $region205: #{tpu_custom_call.1} parent=5 // pred_region
        %s1539 = ssub.s32 %s17, 2
        // Predicated region
        $region207: #{tpu_custom_call.1} parent=205 // pred_check
          %p1540 = pneg %p296
        $region208: #{tpu_custom_call.1} parent=205 // pred_check_branch
          %1542 = sbr.rel (%p1540) target = $region210
        $region209: #{tpu_custom_call.1} parent=205 // pred_region
          %s1543 = sand.u32 %s281, 1
          %s1544 = scalar_lea.sflag [#allocation10], %s1543
          %s1545 = sand.u32 %s281, 1
          %s1546 = smul.addr %s1545, 16
          %s1547 = scalar_lea.vmem [#allocation9], %s1546
          %1548 = dma.done %s1544, 256
        $region210: #{tpu_custom_call.1} parent=205 // pred_fallthru
          _
      $region206: #{tpu_custom_call.1} parent=5 // pred_fallthru
        _
    $region6: #{tpu_custom_call.1} parent=1 // loop_footer
      %s21 = sadd.s32 1, %s17
    $region7: #{tpu_custom_call.1} parent=1 // loop_footer_branch
      %16 = sbr.rel target = $region3
    $region8: #{tpu_custom_call.1} parent=1 // loop_exit
      _
    %1549 = vsyncpa [#allocation10], 1
    %s1550 = scalar_lea.sflag [#allocation10], 1
    %1551 = vsyncpa %s1550, 1

</llo_original>
